<compile_context>
chip_gen: v5e
topology: v5e:2x2
jax: 0.10.0
libtpu: 0.0.40
codegen_flags: <defaults>
</compile_context>

<pallas_src>
import functools

import jax
import jax.numpy as jnp
from jax.experimental import pallas as pl
from jax.experimental.pallas import tpu as pltpu


def bigru_kernel(
    x_ref, bn_s_ref, bn_b_ref,
    wih0_ref, bih0_ref, whhrz0_ref, whhn0_ref, bhn0_ref,
    wih1_ref, bih1_ref, whhrz1_ref, whhn1_ref, bhn1_ref,
    wa1_ref, ba1_ref, wa2_ref, ba2_ref,
    wf1_ref, bf1_ref, wf2_ref, bf2_ref, wf3_ref, bf3_ref,
    out_ref,
    *, hidden_size, seq_len, batch,
):
    H, T, B = hidden_size, seq_len, batch
    H2, H4, H6 = 2 * H, 4 * H, 6 * H
    f32, bf16 = jnp.float32, jnp.bfloat16

    # Column masks for the gate-major [r_f, r_b, z_f, z_b, n_f, n_b] layout (H lanes each).
    col6 = jax.lax.broadcasted_iota(jnp.int32, (1, H6), 1)
    fwd_cols = (col6 % H2) < H                               # forward-direction gate columns
    col2 = jax.lax.broadcasted_iota(jnp.int32, (1, H2), 1)
    fwd_half = col2 < H                                      # forward half of [h_fwd | h_bwd]

    # --- BatchNorm1d (inference): y = x * scale + bias (scale/bias folded on host) ---
    xn = x_ref[...].astype(f32) * bn_s_ref[...] + bn_b_ref[...]         # (T*B, I)

    def run_bidir_layer(x_in, wih_ref, bih_ref, whhrz_ref, whhn_ref, bhn_ref):
        """Fused fwd+bwd GRU layer; returns (T*B, 2H) with row block t = [h_f(t)|h_b(t)]."""
        # Input-side gate projection hoisted out of the time loop (one bf16 matmul).
        # bih already contains b_hr/b_hz folded in on the host.
        gi = (jnp.dot(x_in.astype(bf16), wih_ref[...],
                      preferred_element_type=f32) + bih_ref[...])        # (T*B, 6H)
        # Hoisted direction select: fwd columns read time s, bwd columns read time T-1-s.
        gi_rev = jnp.concatenate(
            [gi[(T - 1 - t) * B:(T - t) * B] for t in range(T)], axis=0)
        g_all = jnp.where(fwd_cols, gi, gi_rev)                          # (T*B, 6H)

        whh_rz = whhrz_ref[...]                    # (2H, 4H) bf16, block-diag by direction
        whh_n = whhn_ref[...]                      # (2H, 2H) bf16, block-diag by direction
        bhn = jnp.broadcast_to(bhn_ref[...], (B, H2))   # n-gate recurrent bias, pre-broadcast

        h = jnp.zeros((B, H2), f32)                # [h_fwd | h_bwd]
        hs = []
        for s in range(T):
            g = g_all[s * B:(s + 1) * B]                                 # (B, 6H)
            h_bf = h.astype(bf16)
            # rz matmul issued first so the sigmoid starts while the n matmul drains.
            gh_rz = jnp.dot(h_bf, whh_rz, preferred_element_type=f32)    # (B, 4H)
            gh_n = jnp.dot(h_bf, whh_n, preferred_element_type=f32)      # (B, 2H)
            rz = jax.nn.sigmoid(g[:, :H4] + gh_rz)   # one sigmoid for r & z, both dirs
            r, z = rz[:, :H2], rz[:, H2:]
            n = jnp.tanh(g[:, H4:] + r * (gh_n + bhn))   # b_hn stays inside r*(.) (PyTorch)
            h = n + z * (h - n)                          # == (1 - z) * n + z * h
            hs.append(h)

        # Assemble per-time outputs: y[t] = [h_fwd(step t) | h_bwd(step T-1-t)].
        h_all = jnp.concatenate(hs, axis=0)                              # (T*B, 2H)
        h_rev = jnp.concatenate(hs[::-1], axis=0)                        # step-reversed
        return jnp.where(fwd_half, h_all, h_rev)                         # (T*B, 2H)

    # TODO(synk): on v7x the independent fwd/bwd chains could be split across the two
    # TensorCores (grid axis of size 2, "parallel"); kept merged here (optimal on v5e/v6e).
    y0 = run_bidir_layer(xn, wih0_ref, bih0_ref, whhrz0_ref, whhn0_ref, bhn0_ref)
    # inter-layer GRU dropout (p=0.3) is identity in inference mode
    y1 = run_bidir_layer(y0, wih1_ref, bih1_ref, whhrz1_ref, whhn1_ref, bhn1_ref)

    # --- attention: Linear(2H,2H) -> tanh -> Linear(2H,1) -> softmax over time ---
    a = jnp.tanh(jnp.dot(y1.astype(bf16), wa1_ref[...],
                         preferred_element_type=f32) + ba1_ref[...])     # (T*B, 2H)
    a3 = a.reshape(T, B, H2)
    g3 = y1.reshape(T, B, H2)
    scores = jnp.sum(a3 * wa2_ref[...], axis=-1, keepdims=True) + ba2_ref[...]   # (T, B, 1)
    m = jnp.max(scores, axis=0, keepdims=True)                                   # (1, B, 1)
    e = jnp.exp(scores - m)                                                      # (T, B, 1)
    denom = jnp.sum(e, axis=0)                                                   # (B, 1)
    ctx = jnp.sum(e * g3, axis=0)                                                # (B, 2H)
    context = ctx / denom                                # == sum_t softmax_t * gru_t

    # --- fc head: Linear -> ReLU -> Linear -> ReLU -> Linear -> Sigmoid (dropout = id) ---
    h1 = jnp.maximum(jnp.dot(context.astype(bf16), wf1_ref[...],
                             preferred_element_type=f32) + bf1_ref[...], 0.0)
    h2 = jnp.maximum(jnp.dot(h1.astype(bf16), wf2_ref[...],
                             preferred_element_type=f32) + bf2_ref[...], 0.0)
    logit = jnp.sum(h2 * wf3_ref[...], axis=-1, keepdims=True) + bf3_ref[...]    # (B, 1)
    out_ref[...] = jax.nn.sigmoid(logit).astype(out_ref.dtype)


# ---------------- host-side parameter packing ----------------

def _gate_major(wf, wb, H):
    """Interleave per-direction [r,z,n] blocks into gate-major [r_f,r_b,z_f,z_b,n_f,n_b]."""
    parts = []
    for g in range(3):
        parts.append(wf[..., g * H:(g + 1) * H])
        parts.append(wb[..., g * H:(g + 1) * H])
    return jnp.concatenate(parts, axis=-1)


def _block_diag_hh(whh_f, whh_b, H, gates):
    """(H,3H) fwd + (H,3H) bwd -> (2H, len(gates)*2H) gate-major, block-diagonal by dir."""
    z = jnp.zeros((H, H), jnp.float32)
    top, bot = [], []
    for g in gates:
        top += [whh_f[:, g * H:(g + 1) * H], z]
        bot += [z, whh_b[:, g * H:(g + 1) * H]]
    return jnp.concatenate([jnp.concatenate(top, axis=-1),
                            jnp.concatenate(bot, axis=-1)], axis=0)


def init_params(key, input_size=9, hidden_size=32):
    """Deterministic synthetic parameters mirroring the PyTorch module, pre-packed."""
    H, I = hidden_size, input_size
    bf16 = jnp.bfloat16
    keys = iter(jax.random.split(key, 64))

    def u(shape, bound):
        return jax.random.uniform(next(keys), shape, jnp.float32, -bound, bound)

    # BatchNorm1d(I), PyTorch defaults: gamma=1, beta=0, running_mean=0, running_var=1
    eps = 1e-5
    gamma = jnp.ones((I,), jnp.float32)
    beta = jnp.zeros((I,), jnp.float32)
    rmean = jnp.zeros((I,), jnp.float32)
    rvar = jnp.ones((I,), jnp.float32)
    scale = gamma / jnp.sqrt(rvar + eps)
    bn_s = scale.reshape(1, I)
    bn_b = (beta - rmean * scale).reshape(1, I)

    k_gru = 1.0 / (H ** 0.5)
    params = [bn_s, bn_b]
    for layer in range(2):
        in_dim = I if layer == 0 else 2 * H
        # raw per-direction weights (PyTorch layout transposed to (in, 3H), gate order [r,z,n])
        wih_f, whh_f = u((in_dim, 3 * H), k_gru), u((H, 3 * H), k_gru)
        bih_f, bhh_f = u((1, 3 * H), k_gru), u((1, 3 * H), k_gru)
        wih_b, whh_b = u((in_dim, 3 * H), k_gru), u((H, 3 * H), k_gru)
        bih_b, bhh_b = u((1, 3 * H), k_gru), u((1, 3 * H), k_gru)

        wih = _gate_major(wih_f, wih_b, H)                    # (in, 6H)
        bih = _gate_major(bih_f, bih_b, H)                    # (1, 6H)
        bhh = _gate_major(bhh_f, bhh_b, H)                    # (1, 6H)
        # Fold b_hr / b_hz into b_ih (valid per PyTorch GRU equations);
        # only b_hn must stay inside r*(W_hn h + b_hn).
        bih = bih.at[:, :4 * H].add(bhh[:, :4 * H])
        bhn = bhh[:, 4 * H:]                                  # (1, 2H)
        whh_rz = _block_diag_hh(whh_f, whh_b, H, (0, 1))      # (2H, 4H)
        whh_n = _block_diag_hh(whh_f, whh_b, H, (2,))         # (2H, 2H)

        params += [
            wih.astype(bf16),          # (in, 6H)  bf16 MXU operand
            bih,                       # (1, 6H)   f32 (b_hr/b_hz folded in)
            whh_rz.astype(bf16),       # (2H, 4H)  bf16 MXU operand
            whh_n.astype(bf16),        # (2H, 2H)  bf16 MXU operand
            bhn,                       # (1, 2H)   f32
        ]

    k1 = 1.0 / ((2 * H) ** 0.5)
    wa1, ba1 = u((2 * H, 2 * H), k1), u((1, 2 * H), k1)
    wa2, ba2 = u((2 * H, 1), k1), u((1, 1), k1)
    wf1, bf1 = u((2 * H, 2 * H), k1), u((1, 2 * H), k1)
    wf2, bf2 = u((2 * H, H), k1), u((1, H), k1)
    k2 = 1.0 / (H ** 0.5)
    wf3, bf3 = u((H, 1), k2), u((1, 1), k2)

    params += [wa1.astype(bf16), ba1, wa2.reshape(1, 2 * H), ba2,
               wf1.astype(bf16), bf1, wf2.astype(bf16), bf2,
               wf3.reshape(1, H), bf3]
    return params


def bigru_forward(x, params, hidden_size):
    B, T, I = x.shape
    B_pad = ((B + 7) // 8) * 8                                   # pad batch to 8 sublanes
    x_tb = jnp.transpose(x, (1, 0, 2)).astype(jnp.float32)       # (T, B, I) time-major
    x_tb = jnp.pad(x_tb, ((0, 0), (0, B_pad - B), (0, 0)))
    x_flat = x_tb.reshape(T * B_pad, I)                          # (T*B_pad, I)

    kernel = functools.partial(bigru_kernel, hidden_size=hidden_size,
                               seq_len=T, batch=B_pad)
    args = [x_flat] + list(params)
    in_specs = [pl.BlockSpec(memory_space=pltpu.MemorySpace.VMEM) for _ in args]

    out = pl.pallas_call(
        kernel,
        out_shape=jax.ShapeDtypeStruct((B_pad, 1), jnp.float32),
        in_specs=in_specs,
        out_specs=pl.BlockSpec(memory_space=pltpu.MemorySpace.VMEM),
    )(*args)
    return out[:B]


if __name__ == "__main__":
    BATCH, SEQ, INPUT, HIDDEN = 2, 8, 9, 32

    key = jax.random.PRNGKey(0)
    kx, kp = jax.random.split(key)
    x = jax.random.normal(kx, (BATCH, SEQ, INPUT), jnp.float32)
    params = init_params(kp, input_size=INPUT, hidden_size=HIDDEN)

    out = bigru_forward(x, params, hidden_size=HIDDEN)
    out = jax.block_until_ready(out)

    assert out.shape == (BATCH, 1), out.shape
    assert bool(jnp.all(jnp.isfinite(out)))
    assert bool(jnp.all((out >= 0.0) & (out <= 1.0)))   # sigmoid output range
    print("KERNEL_OK")
</pallas_src>

<mosaic_0001>
module attributes {stable_mosaic.version = 11 : i64} {
  func.func @bigru_kernel(%arg0: memref<64x9xf32, #tpu.memory_space<vmem>>, %arg1: memref<1x9xf32, #tpu.memory_space<vmem>>, %arg2: memref<1x9xf32, #tpu.memory_space<vmem>>, %arg3: memref<9x192xbf16, #tpu.memory_space<vmem>>, %arg4: memref<1x192xf32, #tpu.memory_space<vmem>>, %arg5: memref<64x128xbf16, #tpu.memory_space<vmem>>, %arg6: memref<64x64xbf16, #tpu.memory_space<vmem>>, %arg7: memref<1x64xf32, #tpu.memory_space<vmem>>, %arg8: memref<64x192xbf16, #tpu.memory_space<vmem>>, %arg9: memref<1x192xf32, #tpu.memory_space<vmem>>, %arg10: memref<64x128xbf16, #tpu.memory_space<vmem>>, %arg11: memref<64x64xbf16, #tpu.memory_space<vmem>>, %arg12: memref<1x64xf32, #tpu.memory_space<vmem>>, %arg13: memref<64x64xbf16, #tpu.memory_space<vmem>>, %arg14: memref<1x64xf32, #tpu.memory_space<vmem>>, %arg15: memref<1x64xf32, #tpu.memory_space<vmem>>, %arg16: memref<1x1xf32, #tpu.memory_space<vmem>>, %arg17: memref<64x64xbf16, #tpu.memory_space<vmem>>, %arg18: memref<1x64xf32, #tpu.memory_space<vmem>>, %arg19: memref<64x32xbf16, #tpu.memory_space<vmem>>, %arg20: memref<1x32xf32, #tpu.memory_space<vmem>>, %arg21: memref<1x32xf32, #tpu.memory_space<vmem>>, %arg22: memref<1x1xf32, #tpu.memory_space<vmem>>, %arg23: memref<8x1xf32, #tpu.memory_space<vmem>>) attributes {dimension_semantics = [], scalar_prefetch = 0 : i64, scratch_operands = 0 : i64, tpu.core_type = #tpu.core_type<tc>} {
    %0 = tpu.iota {dimensions = array<i32: 1>} : vector<1x192xi32>
    %c64_i32 = arith.constant 64 : i32
    %c0_i32 = arith.constant 0 : i32
    %1 = arith.cmpi eq, %c64_i32, %c0_i32 : i32
    %c1_i32 = arith.constant 1 : i32
    %2 = arith.select %1, %c1_i32, %c64_i32 : i32
    %3 = vector.broadcast %2 : i32 to vector<1x192xi32>
    %4 = arith.remsi %0, %3 : vector<1x192xi32>
    %c0_i32_0 = arith.constant 0 : i32
    %5 = vector.broadcast %c0_i32_0 : i32 to vector<1x192xi32>
    %6 = arith.cmpi ne, %4, %5 : vector<1x192xi32>
    %c0_i32_1 = arith.constant 0 : i32
    %7 = vector.broadcast %c0_i32_1 : i32 to vector<1x192xi32>
    %8 = arith.cmpi slt, %4, %7 : vector<1x192xi32>
    %c0_i32_2 = arith.constant 0 : i32
    %9 = arith.cmpi slt, %2, %c0_i32_2 : i32
    %10 = vector.broadcast %9 : i1 to vector<1x192xi1>
    %11 = vector.broadcast %10 : vector<1x192xi1> to vector<1x192xi1>
    %12 = arith.xori %8, %11 : vector<1x192xi1>
    %13 = arith.andi %12, %6 : vector<1x192xi1>
    %14 = vector.broadcast %2 : i32 to vector<1x192xi32>
    %15 = arith.addi %4, %14 : vector<1x192xi32>
    %16 = arith.select %13, %15, %4 : vector<1x192xi1>, vector<1x192xi32>
    %c32_i32 = arith.constant 32 : i32
    %17 = vector.broadcast %c32_i32 : i32 to vector<1x192xi32>
    %18 = arith.cmpi slt, %16, %17 : vector<1x192xi32>
    %19 = tpu.iota {dimensions = array<i32: 1>} : vector<1x64xi32>
    %c32_i32_3 = arith.constant 32 : i32
    %20 = vector.broadcast %c32_i32_3 : i32 to vector<1x64xi32>
    %21 = arith.cmpi slt, %19, %20 : vector<1x64xi32>
    %c0 = arith.constant 0 : index
    %c0_4 = arith.constant 0 : index
    %22 = vector.load %arg0[%c0, %c0_4] : memref<64x9xf32, #tpu.memory_space<vmem>>, vector<64x9xf32>
    %c0_5 = arith.constant 0 : index
    %c0_6 = arith.constant 0 : index
    %23 = vector.load %arg1[%c0_5, %c0_6] : memref<1x9xf32, #tpu.memory_space<vmem>>, vector<1x9xf32>
    %24 = vector.broadcast %23 : vector<1x9xf32> to vector<64x9xf32>
    %25 = arith.mulf %22, %24 : vector<64x9xf32>
    %c0_7 = arith.constant 0 : index
    %c0_8 = arith.constant 0 : index
    %26 = vector.load %arg2[%c0_7, %c0_8] : memref<1x9xf32, #tpu.memory_space<vmem>>, vector<1x9xf32>
    %27 = vector.broadcast %26 : vector<1x9xf32> to vector<64x9xf32>
    %28 = arith.addf %25, %27 : vector<64x9xf32>
    %29 = arith.truncf %28 : vector<64x9xf32> to vector<64x9xbf16>
    %c0_9 = arith.constant 0 : index
    %c0_10 = arith.constant 0 : index
    %30 = vector.load %arg3[%c0_9, %c0_10] : memref<9x192xbf16, #tpu.memory_space<vmem>>, vector<9x192xbf16>
    %cst = arith.constant dense<0.000000e+00> : vector<64x192xf32>
    %31 = tpu.matmul %29, %30, %cst {dimension_numbers = #tpu.dot_dimension_numbers<[1], [0], [0], [1], [0, 0, 1, 1], [], []>} : vector<64x9xbf16>, vector<9x192xbf16>, vector<64x192xf32> -> vector<64x192xf32>
    %c0_11 = arith.constant 0 : index
    %c0_12 = arith.constant 0 : index
    %32 = vector.load %arg4[%c0_11, %c0_12] : memref<1x192xf32, #tpu.memory_space<vmem>>, vector<1x192xf32>
    %33 = vector.broadcast %32 : vector<1x192xf32> to vector<64x192xf32>
    %34 = arith.addf %31, %33 : vector<64x192xf32>
    %35 = vector.extract_strided_slice %34 {offsets = [56, 0], sizes = [8, 192], strides = [1, 1]} : vector<64x192xf32> to vector<8x192xf32>
    %36 = vector.extract_strided_slice %34 {offsets = [48, 0], sizes = [8, 192], strides = [1, 1]} : vector<64x192xf32> to vector<8x192xf32>
    %37 = vector.extract_strided_slice %34 {offsets = [40, 0], sizes = [8, 192], strides = [1, 1]} : vector<64x192xf32> to vector<8x192xf32>
    %38 = vector.extract_strided_slice %34 {offsets = [32, 0], sizes = [8, 192], strides = [1, 1]} : vector<64x192xf32> to vector<8x192xf32>
    %39 = vector.extract_strided_slice %34 {offsets = [24, 0], sizes = [8, 192], strides = [1, 1]} : vector<64x192xf32> to vector<8x192xf32>
    %40 = vector.extract_strided_slice %34 {offsets = [16, 0], sizes = [8, 192], strides = [1, 1]} : vector<64x192xf32> to vector<8x192xf32>
    %41 = vector.extract_strided_slice %34 {offsets = [8, 0], sizes = [8, 192], strides = [1, 1]} : vector<64x192xf32> to vector<8x192xf32>
    %42 = vector.extract_strided_slice %34 {offsets = [0, 0], sizes = [8, 192], strides = [1, 1]} : vector<64x192xf32> to vector<8x192xf32>
    %43 = tpu.concatenate %35, %36, %37, %38, %39, %40, %41, %42 in 0 : vector<8x192xf32>, vector<8x192xf32>, vector<8x192xf32>, vector<8x192xf32>, vector<8x192xf32>, vector<8x192xf32>, vector<8x192xf32>, vector<8x192xf32> -> vector<64x192xf32>
    %44 = vector.shape_cast %18 : vector<1x192xi1> to vector<1x192xi1>
    %45 = vector.broadcast %44 : vector<1x192xi1> to vector<64x192xi1>
    %46 = arith.select %45, %34, %43 : vector<64x192xi1>, vector<64x192xf32>
    %c0_13 = arith.constant 0 : index
    %c0_14 = arith.constant 0 : index
    %47 = vector.load %arg5[%c0_13, %c0_14] : memref<64x128xbf16, #tpu.memory_space<vmem>>, vector<64x128xbf16>
    %c0_15 = arith.constant 0 : index
    %c0_16 = arith.constant 0 : index
    %48 = vector.load %arg6[%c0_15, %c0_16] : memref<64x64xbf16, #tpu.memory_space<vmem>>, vector<64x64xbf16>
    %c0_17 = arith.constant 0 : index
    %c0_18 = arith.constant 0 : index
    %49 = vector.load %arg7[%c0_17, %c0_18] : memref<1x64xf32, #tpu.memory_space<vmem>>, vector<1x64xf32>
    %50 = vector.shape_cast %49 : vector<1x64xf32> to vector<1x64xf32>
    %51 = vector.broadcast %50 : vector<1x64xf32> to vector<8x64xf32>
    %cst_19 = arith.constant 0.000000e+00 : f32
    %52 = vector.broadcast %cst_19 : f32 to vector<8x64xf32>
    %53 = vector.extract_strided_slice %46 {offsets = [0, 0], sizes = [8, 192], strides = [1, 1]} : vector<64x192xf32> to vector<8x192xf32>
    %54 = arith.truncf %52 : vector<8x64xf32> to vector<8x64xbf16>
    %cst_20 = arith.constant dense<0.000000e+00> : vector<8x128xf32>
    %55 = tpu.matmul %54, %47, %cst_20 {dimension_numbers = #tpu.dot_dimension_numbers<[1], [0], [0], [1], [0, 0, 1, 1], [], []>} : vector<8x64xbf16>, vector<64x128xbf16>, vector<8x128xf32> -> vector<8x128xf32>
    %cst_21 = arith.constant dense<0.000000e+00> : vector<8x64xf32>
    %56 = tpu.matmul %54, %48, %cst_21 {dimension_numbers = #tpu.dot_dimension_numbers<[1], [0], [0], [1], [0, 0, 1, 1], [], []>} : vector<8x64xbf16>, vector<64x64xbf16>, vector<8x64xf32> -> vector<8x64xf32>
    %57 = vector.extract_strided_slice %53 {offsets = [0, 0], sizes = [8, 128], strides = [1, 1]} : vector<8x192xf32> to vector<8x128xf32>
    %58 = arith.addf %57, %55 : vector<8x128xf32>
    %59 = arith.negf %58 : vector<8x128xf32>
    %60 = math.exp %59 : vector<8x128xf32>
    %cst_22 = arith.constant 1.000000e+00 : f32
    %61 = vector.broadcast %cst_22 : f32 to vector<8x128xf32>
    %62 = arith.addf %61, %60 : vector<8x128xf32>
    %63 = arith.divf %61, %62 : vector<8x128xf32>
    %64 = vector.extract_strided_slice %63 {offsets = [0, 0], sizes = [8, 64], strides = [1, 1]} : vector<8x128xf32> to vector<8x64xf32>
    %65 = vector.extract_strided_slice %63 {offsets = [0, 64], sizes = [8, 64], strides = [1, 1]} : vector<8x128xf32> to vector<8x64xf32>
    %66 = vector.extract_strided_slice %53 {offsets = [0, 128], sizes = [8, 64], strides = [1, 1]} : vector<8x192xf32> to vector<8x64xf32>
    %67 = arith.addf %56, %51 : vector<8x64xf32>
    %68 = arith.mulf %64, %67 : vector<8x64xf32>
    %69 = arith.addf %66, %68 : vector<8x64xf32>
    %70 = math.tanh %69 : vector<8x64xf32>
    %71 = arith.subf %52, %70 : vector<8x64xf32>
    %72 = arith.mulf %65, %71 : vector<8x64xf32>
    %73 = arith.addf %70, %72 : vector<8x64xf32>
    %74 = vector.extract_strided_slice %46 {offsets = [8, 0], sizes = [8, 192], strides = [1, 1]} : vector<64x192xf32> to vector<8x192xf32>
    %75 = arith.truncf %73 : vector<8x64xf32> to vector<8x64xbf16>
    %cst_23 = arith.constant dense<0.000000e+00> : vector<8x128xf32>
    %76 = tpu.matmul %75, %47, %cst_23 {dimension_numbers = #tpu.dot_dimension_numbers<[1], [0], [0], [1], [0, 0, 1, 1], [], []>} : vector<8x64xbf16>, vector<64x128xbf16>, vector<8x128xf32> -> vector<8x128xf32>
    %cst_24 = arith.constant dense<0.000000e+00> : vector<8x64xf32>
    %77 = tpu.matmul %75, %48, %cst_24 {dimension_numbers = #tpu.dot_dimension_numbers<[1], [0], [0], [1], [0, 0, 1, 1], [], []>} : vector<8x64xbf16>, vector<64x64xbf16>, vector<8x64xf32> -> vector<8x64xf32>
    %78 = vector.extract_strided_slice %74 {offsets = [0, 0], sizes = [8, 128], strides = [1, 1]} : vector<8x192xf32> to vector<8x128xf32>
    %79 = arith.addf %78, %76 : vector<8x128xf32>
    %80 = arith.negf %79 : vector<8x128xf32>
    %81 = math.exp %80 : vector<8x128xf32>
    %cst_25 = arith.constant 1.000000e+00 : f32
    %82 = vector.broadcast %cst_25 : f32 to vector<8x128xf32>
    %83 = arith.addf %82, %81 : vector<8x128xf32>
    %84 = arith.divf %82, %83 : vector<8x128xf32>
    %85 = vector.extract_strided_slice %84 {offsets = [0, 0], sizes = [8, 64], strides = [1, 1]} : vector<8x128xf32> to vector<8x64xf32>
    %86 = vector.extract_strided_slice %84 {offsets = [0, 64], sizes = [8, 64], strides = [1, 1]} : vector<8x128xf32> to vector<8x64xf32>
    %87 = vector.extract_strided_slice %74 {offsets = [0, 128], sizes = [8, 64], strides = [1, 1]} : vector<8x192xf32> to vector<8x64xf32>
    %88 = arith.addf %77, %51 : vector<8x64xf32>
    %89 = arith.mulf %85, %88 : vector<8x64xf32>
    %90 = arith.addf %87, %89 : vector<8x64xf32>
    %91 = math.tanh %90 : vector<8x64xf32>
    %92 = arith.subf %73, %91 : vector<8x64xf32>
    %93 = arith.mulf %86, %92 : vector<8x64xf32>
    %94 = arith.addf %91, %93 : vector<8x64xf32>
    %95 = vector.extract_strided_slice %46 {offsets = [16, 0], sizes = [8, 192], strides = [1, 1]} : vector<64x192xf32> to vector<8x192xf32>
    %96 = arith.truncf %94 : vector<8x64xf32> to vector<8x64xbf16>
    %cst_26 = arith.constant dense<0.000000e+00> : vector<8x128xf32>
    %97 = tpu.matmul %96, %47, %cst_26 {dimension_numbers = #tpu.dot_dimension_numbers<[1], [0], [0], [1], [0, 0, 1, 1], [], []>} : vector<8x64xbf16>, vector<64x128xbf16>, vector<8x128xf32> -> vector<8x128xf32>
    %cst_27 = arith.constant dense<0.000000e+00> : vector<8x64xf32>
    %98 = tpu.matmul %96, %48, %cst_27 {dimension_numbers = #tpu.dot_dimension_numbers<[1], [0], [0], [1], [0, 0, 1, 1], [], []>} : vector<8x64xbf16>, vector<64x64xbf16>, vector<8x64xf32> -> vector<8x64xf32>
    %99 = vector.extract_strided_slice %95 {offsets = [0, 0], sizes = [8, 128], strides = [1, 1]} : vector<8x192xf32> to vector<8x128xf32>
    %100 = arith.addf %99, %97 : vector<8x128xf32>
    %101 = arith.negf %100 : vector<8x128xf32>
    %102 = math.exp %101 : vector<8x128xf32>
    %cst_28 = arith.constant 1.000000e+00 : f32
    %103 = vector.broadcast %cst_28 : f32 to vector<8x128xf32>
    %104 = arith.addf %103, %102 : vector<8x128xf32>
    %105 = arith.divf %103, %104 : vector<8x128xf32>
    %106 = vector.extract_strided_slice %105 {offsets = [0, 0], sizes = [8, 64], strides = [1, 1]} : vector<8x128xf32> to vector<8x64xf32>
    %107 = vector.extract_strided_slice %105 {offsets = [0, 64], sizes = [8, 64], strides = [1, 1]} : vector<8x128xf32> to vector<8x64xf32>
    %108 = vector.extract_strided_slice %95 {offsets = [0, 128], sizes = [8, 64], strides = [1, 1]} : vector<8x192xf32> to vector<8x64xf32>
    %109 = arith.addf %98, %51 : vector<8x64xf32>
    %110 = arith.mulf %106, %109 : vector<8x64xf32>
    %111 = arith.addf %108, %110 : vector<8x64xf32>
    %112 = math.tanh %111 : vector<8x64xf32>
    %113 = arith.subf %94, %112 : vector<8x64xf32>
    %114 = arith.mulf %107, %113 : vector<8x64xf32>
    %115 = arith.addf %112, %114 : vector<8x64xf32>
    %116 = vector.extract_strided_slice %46 {offsets = [24, 0], sizes = [8, 192], strides = [1, 1]} : vector<64x192xf32> to vector<8x192xf32>
    %117 = arith.truncf %115 : vector<8x64xf32> to vector<8x64xbf16>
    %cst_29 = arith.constant dense<0.000000e+00> : vector<8x128xf32>
    %118 = tpu.matmul %117, %47, %cst_29 {dimension_numbers = #tpu.dot_dimension_numbers<[1], [0], [0], [1], [0, 0, 1, 1], [], []>} : vector<8x64xbf16>, vector<64x128xbf16>, vector<8x128xf32> -> vector<8x128xf32>
    %cst_30 = arith.constant dense<0.000000e+00> : vector<8x64xf32>
    %119 = tpu.matmul %117, %48, %cst_30 {dimension_numbers = #tpu.dot_dimension_numbers<[1], [0], [0], [1], [0, 0, 1, 1], [], []>} : vector<8x64xbf16>, vector<64x64xbf16>, vector<8x64xf32> -> vector<8x64xf32>
    %120 = vector.extract_strided_slice %116 {offsets = [0, 0], sizes = [8, 128], strides = [1, 1]} : vector<8x192xf32> to vector<8x128xf32>
    %121 = arith.addf %120, %118 : vector<8x128xf32>
    %122 = arith.negf %121 : vector<8x128xf32>
    %123 = math.exp %122 : vector<8x128xf32>
    %cst_31 = arith.constant 1.000000e+00 : f32
    %124 = vector.broadcast %cst_31 : f32 to vector<8x128xf32>
    %125 = arith.addf %124, %123 : vector<8x128xf32>
    %126 = arith.divf %124, %125 : vector<8x128xf32>
    %127 = vector.extract_strided_slice %126 {offsets = [0, 0], sizes = [8, 64], strides = [1, 1]} : vector<8x128xf32> to vector<8x64xf32>
    %128 = vector.extract_strided_slice %126 {offsets = [0, 64], sizes = [8, 64], strides = [1, 1]} : vector<8x128xf32> to vector<8x64xf32>
    %129 = vector.extract_strided_slice %116 {offsets = [0, 128], sizes = [8, 64], strides = [1, 1]} : vector<8x192xf32> to vector<8x64xf32>
    %130 = arith.addf %119, %51 : vector<8x64xf32>
    %131 = arith.mulf %127, %130 : vector<8x64xf32>
    %132 = arith.addf %129, %131 : vector<8x64xf32>
    %133 = math.tanh %132 : vector<8x64xf32>
    %134 = arith.subf %115, %133 : vector<8x64xf32>
    %135 = arith.mulf %128, %134 : vector<8x64xf32>
    %136 = arith.addf %133, %135 : vector<8x64xf32>
    %137 = vector.extract_strided_slice %46 {offsets = [32, 0], sizes = [8, 192], strides = [1, 1]} : vector<64x192xf32> to vector<8x192xf32>
    %138 = arith.truncf %136 : vector<8x64xf32> to vector<8x64xbf16>
    %cst_32 = arith.constant dense<0.000000e+00> : vector<8x128xf32>
    %139 = tpu.matmul %138, %47, %cst_32 {dimension_numbers = #tpu.dot_dimension_numbers<[1], [0], [0], [1], [0, 0, 1, 1], [], []>} : vector<8x64xbf16>, vector<64x128xbf16>, vector<8x128xf32> -> vector<8x128xf32>
    %cst_33 = arith.constant dense<0.000000e+00> : vector<8x64xf32>
    %140 = tpu.matmul %138, %48, %cst_33 {dimension_numbers = #tpu.dot_dimension_numbers<[1], [0], [0], [1], [0, 0, 1, 1], [], []>} : vector<8x64xbf16>, vector<64x64xbf16>, vector<8x64xf32> -> vector<8x64xf32>
    %141 = vector.extract_strided_slice %137 {offsets = [0, 0], sizes = [8, 128], strides = [1, 1]} : vector<8x192xf32> to vector<8x128xf32>
    %142 = arith.addf %141, %139 : vector<8x128xf32>
    %143 = arith.negf %142 : vector<8x128xf32>
    %144 = math.exp %143 : vector<8x128xf32>
    %cst_34 = arith.constant 1.000000e+00 : f32
    %145 = vector.broadcast %cst_34 : f32 to vector<8x128xf32>
    %146 = arith.addf %145, %144 : vector<8x128xf32>
    %147 = arith.divf %145, %146 : vector<8x128xf32>
    %148 = vector.extract_strided_slice %147 {offsets = [0, 0], sizes = [8, 64], strides = [1, 1]} : vector<8x128xf32> to vector<8x64xf32>
    %149 = vector.extract_strided_slice %147 {offsets = [0, 64], sizes = [8, 64], strides = [1, 1]} : vector<8x128xf32> to vector<8x64xf32>
    %150 = vector.extract_strided_slice %137 {offsets = [0, 128], sizes = [8, 64], strides = [1, 1]} : vector<8x192xf32> to vector<8x64xf32>
    %151 = arith.addf %140, %51 : vector<8x64xf32>
    %152 = arith.mulf %148, %151 : vector<8x64xf32>
    %153 = arith.addf %150, %152 : vector<8x64xf32>
    %154 = math.tanh %153 : vector<8x64xf32>
    %155 = arith.subf %136, %154 : vector<8x64xf32>
    %156 = arith.mulf %149, %155 : vector<8x64xf32>
    %157 = arith.addf %154, %156 : vector<8x64xf32>
    %158 = vector.extract_strided_slice %46 {offsets = [40, 0], sizes = [8, 192], strides = [1, 1]} : vector<64x192xf32> to vector<8x192xf32>
    %159 = arith.truncf %157 : vector<8x64xf32> to vector<8x64xbf16>
    %cst_35 = arith.constant dense<0.000000e+00> : vector<8x128xf32>
    %160 = tpu.matmul %159, %47, %cst_35 {dimension_numbers = #tpu.dot_dimension_numbers<[1], [0], [0], [1], [0, 0, 1, 1], [], []>} : vector<8x64xbf16>, vector<64x128xbf16>, vector<8x128xf32> -> vector<8x128xf32>
    %cst_36 = arith.constant dense<0.000000e+00> : vector<8x64xf32>
    %161 = tpu.matmul %159, %48, %cst_36 {dimension_numbers = #tpu.dot_dimension_numbers<[1], [0], [0], [1], [0, 0, 1, 1], [], []>} : vector<8x64xbf16>, vector<64x64xbf16>, vector<8x64xf32> -> vector<8x64xf32>
    %162 = vector.extract_strided_slice %158 {offsets = [0, 0], sizes = [8, 128], strides = [1, 1]} : vector<8x192xf32> to vector<8x128xf32>
    %163 = arith.addf %162, %160 : vector<8x128xf32>
    %164 = arith.negf %163 : vector<8x128xf32>
    %165 = math.exp %164 : vector<8x128xf32>
    %cst_37 = arith.constant 1.000000e+00 : f32
    %166 = vector.broadcast %cst_37 : f32 to vector<8x128xf32>
    %167 = arith.addf %166, %165 : vector<8x128xf32>
    %168 = arith.divf %166, %167 : vector<8x128xf32>
    %169 = vector.extract_strided_slice %168 {offsets = [0, 0], sizes = [8, 64], strides = [1, 1]} : vector<8x128xf32> to vector<8x64xf32>
    %170 = vector.extract_strided_slice %168 {offsets = [0, 64], sizes = [8, 64], strides = [1, 1]} : vector<8x128xf32> to vector<8x64xf32>
    %171 = vector.extract_strided_slice %158 {offsets = [0, 128], sizes = [8, 64], strides = [1, 1]} : vector<8x192xf32> to vector<8x64xf32>
    %172 = arith.addf %161, %51 : vector<8x64xf32>
    %173 = arith.mulf %169, %172 : vector<8x64xf32>
    %174 = arith.addf %171, %173 : vector<8x64xf32>
    %175 = math.tanh %174 : vector<8x64xf32>
    %176 = arith.subf %157, %175 : vector<8x64xf32>
    %177 = arith.mulf %170, %176 : vector<8x64xf32>
    %178 = arith.addf %175, %177 : vector<8x64xf32>
    %179 = vector.extract_strided_slice %46 {offsets = [48, 0], sizes = [8, 192], strides = [1, 1]} : vector<64x192xf32> to vector<8x192xf32>
    %180 = arith.truncf %178 : vector<8x64xf32> to vector<8x64xbf16>
    %cst_38 = arith.constant dense<0.000000e+00> : vector<8x128xf32>
    %181 = tpu.matmul %180, %47, %cst_38 {dimension_numbers = #tpu.dot_dimension_numbers<[1], [0], [0], [1], [0, 0, 1, 1], [], []>} : vector<8x64xbf16>, vector<64x128xbf16>, vector<8x128xf32> -> vector<8x128xf32>
    %cst_39 = arith.constant dense<0.000000e+00> : vector<8x64xf32>
    %182 = tpu.matmul %180, %48, %cst_39 {dimension_numbers = #tpu.dot_dimension_numbers<[1], [0], [0], [1], [0, 0, 1, 1], [], []>} : vector<8x64xbf16>, vector<64x64xbf16>, vector<8x64xf32> -> vector<8x64xf32>
    %183 = vector.extract_strided_slice %179 {offsets = [0, 0], sizes = [8, 128], strides = [1, 1]} : vector<8x192xf32> to vector<8x128xf32>
    %184 = arith.addf %183, %181 : vector<8x128xf32>
    %185 = arith.negf %184 : vector<8x128xf32>
    %186 = math.exp %185 : vector<8x128xf32>
    %cst_40 = arith.constant 1.000000e+00 : f32
    %187 = vector.broadcast %cst_40 : f32 to vector<8x128xf32>
    %188 = arith.addf %187, %186 : vector<8x128xf32>
    %189 = arith.divf %187, %188 : vector<8x128xf32>
    %190 = vector.extract_strided_slice %189 {offsets = [0, 0], sizes = [8, 64], strides = [1, 1]} : vector<8x128xf32> to vector<8x64xf32>
    %191 = vector.extract_strided_slice %189 {offsets = [0, 64], sizes = [8, 64], strides = [1, 1]} : vector<8x128xf32> to vector<8x64xf32>
    %192 = vector.extract_strided_slice %179 {offsets = [0, 128], sizes = [8, 64], strides = [1, 1]} : vector<8x192xf32> to vector<8x64xf32>
    %193 = arith.addf %182, %51 : vector<8x64xf32>
    %194 = arith.mulf %190, %193 : vector<8x64xf32>
    %195 = arith.addf %192, %194 : vector<8x64xf32>
    %196 = math.tanh %195 : vector<8x64xf32>
    %197 = arith.subf %178, %196 : vector<8x64xf32>
    %198 = arith.mulf %191, %197 : vector<8x64xf32>
    %199 = arith.addf %196, %198 : vector<8x64xf32>
    %200 = vector.extract_strided_slice %46 {offsets = [56, 0], sizes = [8, 192], strides = [1, 1]} : vector<64x192xf32> to vector<8x192xf32>
    %201 = arith.truncf %199 : vector<8x64xf32> to vector<8x64xbf16>
    %cst_41 = arith.constant dense<0.000000e+00> : vector<8x128xf32>
    %202 = tpu.matmul %201, %47, %cst_41 {dimension_numbers = #tpu.dot_dimension_numbers<[1], [0], [0], [1], [0, 0, 1, 1], [], []>} : vector<8x64xbf16>, vector<64x128xbf16>, vector<8x128xf32> -> vector<8x128xf32>
    %cst_42 = arith.constant dense<0.000000e+00> : vector<8x64xf32>
    %203 = tpu.matmul %201, %48, %cst_42 {dimension_numbers = #tpu.dot_dimension_numbers<[1], [0], [0], [1], [0, 0, 1, 1], [], []>} : vector<8x64xbf16>, vector<64x64xbf16>, vector<8x64xf32> -> vector<8x64xf32>
    %204 = vector.extract_strided_slice %200 {offsets = [0, 0], sizes = [8, 128], strides = [1, 1]} : vector<8x192xf32> to vector<8x128xf32>
    %205 = arith.addf %204, %202 : vector<8x128xf32>
    %206 = arith.negf %205 : vector<8x128xf32>
    %207 = math.exp %206 : vector<8x128xf32>
    %cst_43 = arith.constant 1.000000e+00 : f32
    %208 = vector.broadcast %cst_43 : f32 to vector<8x128xf32>
    %209 = arith.addf %208, %207 : vector<8x128xf32>
    %210 = arith.divf %208, %209 : vector<8x128xf32>
    %211 = vector.extract_strided_slice %210 {offsets = [0, 0], sizes = [8, 64], strides = [1, 1]} : vector<8x128xf32> to vector<8x64xf32>
    %212 = vector.extract_strided_slice %210 {offsets = [0, 64], sizes = [8, 64], strides = [1, 1]} : vector<8x128xf32> to vector<8x64xf32>
    %213 = vector.extract_strided_slice %200 {offsets = [0, 128], sizes = [8, 64], strides = [1, 1]} : vector<8x192xf32> to vector<8x64xf32>
    %214 = arith.addf %203, %51 : vector<8x64xf32>
    %215 = arith.mulf %211, %214 : vector<8x64xf32>
    %216 = arith.addf %213, %215 : vector<8x64xf32>
    %217 = math.tanh %216 : vector<8x64xf32>
    %218 = arith.subf %199, %217 : vector<8x64xf32>
    %219 = arith.mulf %212, %218 : vector<8x64xf32>
    %220 = arith.addf %217, %219 : vector<8x64xf32>
    %221 = tpu.concatenate %73, %94, %115, %136, %157, %178, %199, %220 in 0 : vector<8x64xf32>, vector<8x64xf32>, vector<8x64xf32>, vector<8x64xf32>, vector<8x64xf32>, vector<8x64xf32>, vector<8x64xf32>, vector<8x64xf32> -> vector<64x64xf32>
    %222 = tpu.concatenate %220, %199, %178, %157, %136, %115, %94, %73 in 0 : vector<8x64xf32>, vector<8x64xf32>, vector<8x64xf32>, vector<8x64xf32>, vector<8x64xf32>, vector<8x64xf32>, vector<8x64xf32>, vector<8x64xf32> -> vector<64x64xf32>
    %223 = vector.shape_cast %21 : vector<1x64xi1> to vector<1x64xi1>
    %224 = vector.broadcast %223 : vector<1x64xi1> to vector<64x64xi1>
    %225 = arith.select %224, %221, %222 : vector<64x64xi1>, vector<64x64xf32>
    %226 = arith.truncf %225 : vector<64x64xf32> to vector<64x64xbf16>
    %c0_44 = arith.constant 0 : index
    %c0_45 = arith.constant 0 : index
    %227 = vector.load %arg8[%c0_44, %c0_45] : memref<64x192xbf16, #tpu.memory_space<vmem>>, vector<64x192xbf16>
    %cst_46 = arith.constant dense<0.000000e+00> : vector<64x192xf32>
    %228 = tpu.matmul %226, %227, %cst_46 {dimension_numbers = #tpu.dot_dimension_numbers<[1], [0], [0], [1], [0, 0, 1, 1], [], []>} : vector<64x64xbf16>, vector<64x192xbf16>, vector<64x192xf32> -> vector<64x192xf32>
    %c0_47 = arith.constant 0 : index
    %c0_48 = arith.constant 0 : index
    %229 = vector.load %arg9[%c0_47, %c0_48] : memref<1x192xf32, #tpu.memory_space<vmem>>, vector<1x192xf32>
    %230 = vector.broadcast %229 : vector<1x192xf32> to vector<64x192xf32>
    %231 = arith.addf %228, %230 : vector<64x192xf32>
    %232 = vector.extract_strided_slice %231 {offsets = [56, 0], sizes = [8, 192], strides = [1, 1]} : vector<64x192xf32> to vector<8x192xf32>
    %233 = vector.extract_strided_slice %231 {offsets = [48, 0], sizes = [8, 192], strides = [1, 1]} : vector<64x192xf32> to vector<8x192xf32>
    %234 = vector.extract_strided_slice %231 {offsets = [40, 0], sizes = [8, 192], strides = [1, 1]} : vector<64x192xf32> to vector<8x192xf32>
    %235 = vector.extract_strided_slice %231 {offsets = [32, 0], sizes = [8, 192], strides = [1, 1]} : vector<64x192xf32> to vector<8x192xf32>
    %236 = vector.extract_strided_slice %231 {offsets = [24, 0], sizes = [8, 192], strides = [1, 1]} : vector<64x192xf32> to vector<8x192xf32>
    %237 = vector.extract_strided_slice %231 {offsets = [16, 0], sizes = [8, 192], strides = [1, 1]} : vector<64x192xf32> to vector<8x192xf32>
    %238 = vector.extract_strided_slice %231 {offsets = [8, 0], sizes = [8, 192], strides = [1, 1]} : vector<64x192xf32> to vector<8x192xf32>
    %239 = vector.extract_strided_slice %231 {offsets = [0, 0], sizes = [8, 192], strides = [1, 1]} : vector<64x192xf32> to vector<8x192xf32>
    %240 = tpu.concatenate %232, %233, %234, %235, %236, %237, %238, %239 in 0 : vector<8x192xf32>, vector<8x192xf32>, vector<8x192xf32>, vector<8x192xf32>, vector<8x192xf32>, vector<8x192xf32>, vector<8x192xf32>, vector<8x192xf32> -> vector<64x192xf32>
    %241 = vector.shape_cast %18 : vector<1x192xi1> to vector<1x192xi1>
    %242 = vector.broadcast %241 : vector<1x192xi1> to vector<64x192xi1>
    %243 = arith.select %242, %231, %240 : vector<64x192xi1>, vector<64x192xf32>
    %c0_49 = arith.constant 0 : index
    %c0_50 = arith.constant 0 : index
    %244 = vector.load %arg10[%c0_49, %c0_50] : memref<64x128xbf16, #tpu.memory_space<vmem>>, vector<64x128xbf16>
    %c0_51 = arith.constant 0 : index
    %c0_52 = arith.constant 0 : index
    %245 = vector.load %arg11[%c0_51, %c0_52] : memref<64x64xbf16, #tpu.memory_space<vmem>>, vector<64x64xbf16>
    %c0_53 = arith.constant 0 : index
    %c0_54 = arith.constant 0 : index
    %246 = vector.load %arg12[%c0_53, %c0_54] : memref<1x64xf32, #tpu.memory_space<vmem>>, vector<1x64xf32>
    %247 = vector.shape_cast %246 : vector<1x64xf32> to vector<1x64xf32>
    %248 = vector.broadcast %247 : vector<1x64xf32> to vector<8x64xf32>
    %cst_55 = arith.constant 0.000000e+00 : f32
    %249 = vector.broadcast %cst_55 : f32 to vector<8x64xf32>
    %250 = vector.extract_strided_slice %243 {offsets = [0, 0], sizes = [8, 192], strides = [1, 1]} : vector<64x192xf32> to vector<8x192xf32>
    %251 = arith.truncf %249 : vector<8x64xf32> to vector<8x64xbf16>
    %cst_56 = arith.constant dense<0.000000e+00> : vector<8x128xf32>
    %252 = tpu.matmul %251, %244, %cst_56 {dimension_numbers = #tpu.dot_dimension_numbers<[1], [0], [0], [1], [0, 0, 1, 1], [], []>} : vector<8x64xbf16>, vector<64x128xbf16>, vector<8x128xf32> -> vector<8x128xf32>
    %cst_57 = arith.constant dense<0.000000e+00> : vector<8x64xf32>
    %253 = tpu.matmul %251, %245, %cst_57 {dimension_numbers = #tpu.dot_dimension_numbers<[1], [0], [0], [1], [0, 0, 1, 1], [], []>} : vector<8x64xbf16>, vector<64x64xbf16>, vector<8x64xf32> -> vector<8x64xf32>
    %254 = vector.extract_strided_slice %250 {offsets = [0, 0], sizes = [8, 128], strides = [1, 1]} : vector<8x192xf32> to vector<8x128xf32>
    %255 = arith.addf %254, %252 : vector<8x128xf32>
    %256 = arith.negf %255 : vector<8x128xf32>
    %257 = math.exp %256 : vector<8x128xf32>
    %cst_58 = arith.constant 1.000000e+00 : f32
    %258 = vector.broadcast %cst_58 : f32 to vector<8x128xf32>
    %259 = arith.addf %258, %257 : vector<8x128xf32>
    %260 = arith.divf %258, %259 : vector<8x128xf32>
    %261 = vector.extract_strided_slice %260 {offsets = [0, 0], sizes = [8, 64], strides = [1, 1]} : vector<8x128xf32> to vector<8x64xf32>
    %262 = vector.extract_strided_slice %260 {offsets = [0, 64], sizes = [8, 64], strides = [1, 1]} : vector<8x128xf32> to vector<8x64xf32>
    %263 = vector.extract_strided_slice %250 {offsets = [0, 128], sizes = [8, 64], strides = [1, 1]} : vector<8x192xf32> to vector<8x64xf32>
    %264 = arith.addf %253, %248 : vector<8x64xf32>
    %265 = arith.mulf %261, %264 : vector<8x64xf32>
    %266 = arith.addf %263, %265 : vector<8x64xf32>
    %267 = math.tanh %266 : vector<8x64xf32>
    %268 = arith.subf %249, %267 : vector<8x64xf32>
    %269 = arith.mulf %262, %268 : vector<8x64xf32>
    %270 = arith.addf %267, %269 : vector<8x64xf32>
    %271 = vector.extract_strided_slice %243 {offsets = [8, 0], sizes = [8, 192], strides = [1, 1]} : vector<64x192xf32> to vector<8x192xf32>
    %272 = arith.truncf %270 : vector<8x64xf32> to vector<8x64xbf16>
    %cst_59 = arith.constant dense<0.000000e+00> : vector<8x128xf32>
    %273 = tpu.matmul %272, %244, %cst_59 {dimension_numbers = #tpu.dot_dimension_numbers<[1], [0], [0], [1], [0, 0, 1, 1], [], []>} : vector<8x64xbf16>, vector<64x128xbf16>, vector<8x128xf32> -> vector<8x128xf32>
    %cst_60 = arith.constant dense<0.000000e+00> : vector<8x64xf32>
    %274 = tpu.matmul %272, %245, %cst_60 {dimension_numbers = #tpu.dot_dimension_numbers<[1], [0], [0], [1], [0, 0, 1, 1], [], []>} : vector<8x64xbf16>, vector<64x64xbf16>, vector<8x64xf32> -> vector<8x64xf32>
    %275 = vector.extract_strided_slice %271 {offsets = [0, 0], sizes = [8, 128], strides = [1, 1]} : vector<8x192xf32> to vector<8x128xf32>
    %276 = arith.addf %275, %273 : vector<8x128xf32>
    %277 = arith.negf %276 : vector<8x128xf32>
    %278 = math.exp %277 : vector<8x128xf32>
    %cst_61 = arith.constant 1.000000e+00 : f32
    %279 = vector.broadcast %cst_61 : f32 to vector<8x128xf32>
    %280 = arith.addf %279, %278 : vector<8x128xf32>
    %281 = arith.divf %279, %280 : vector<8x128xf32>
    %282 = vector.extract_strided_slice %281 {offsets = [0, 0], sizes = [8, 64], strides = [1, 1]} : vector<8x128xf32> to vector<8x64xf32>
    %283 = vector.extract_strided_slice %281 {offsets = [0, 64], sizes = [8, 64], strides = [1, 1]} : vector<8x128xf32> to vector<8x64xf32>
    %284 = vector.extract_strided_slice %271 {offsets = [0, 128], sizes = [8, 64], strides = [1, 1]} : vector<8x192xf32> to vector<8x64xf32>
    %285 = arith.addf %274, %248 : vector<8x64xf32>
    %286 = arith.mulf %282, %285 : vector<8x64xf32>
    %287 = arith.addf %284, %286 : vector<8x64xf32>
    %288 = math.tanh %287 : vector<8x64xf32>
    %289 = arith.subf %270, %288 : vector<8x64xf32>
    %290 = arith.mulf %283, %289 : vector<8x64xf32>
    %291 = arith.addf %288, %290 : vector<8x64xf32>
    %292 = vector.extract_strided_slice %243 {offsets = [16, 0], sizes = [8, 192], strides = [1, 1]} : vector<64x192xf32> to vector<8x192xf32>
    %293 = arith.truncf %291 : vector<8x64xf32> to vector<8x64xbf16>
    %cst_62 = arith.constant dense<0.000000e+00> : vector<8x128xf32>
    %294 = tpu.matmul %293, %244, %cst_62 {dimension_numbers = #tpu.dot_dimension_numbers<[1], [0], [0], [1], [0, 0, 1, 1], [], []>} : vector<8x64xbf16>, vector<64x128xbf16>, vector<8x128xf32> -> vector<8x128xf32>
    %cst_63 = arith.constant dense<0.000000e+00> : vector<8x64xf32>
    %295 = tpu.matmul %293, %245, %cst_63 {dimension_numbers = #tpu.dot_dimension_numbers<[1], [0], [0], [1], [0, 0, 1, 1], [], []>} : vector<8x64xbf16>, vector<64x64xbf16>, vector<8x64xf32> -> vector<8x64xf32>
    %296 = vector.extract_strided_slice %292 {offsets = [0, 0], sizes = [8, 128], strides = [1, 1]} : vector<8x192xf32> to vector<8x128xf32>
    %297 = arith.addf %296, %294 : vector<8x128xf32>
    %298 = arith.negf %297 : vector<8x128xf32>
    %299 = math.exp %298 : vector<8x128xf32>
    %cst_64 = arith.constant 1.000000e+00 : f32
    %300 = vector.broadcast %cst_64 : f32 to vector<8x128xf32>
    %301 = arith.addf %300, %299 : vector<8x128xf32>
    %302 = arith.divf %300, %301 : vector<8x128xf32>
    %303 = vector.extract_strided_slice %302 {offsets = [0, 0], sizes = [8, 64], strides = [1, 1]} : vector<8x128xf32> to vector<8x64xf32>
    %304 = vector.extract_strided_slice %302 {offsets = [0, 64], sizes = [8, 64], strides = [1, 1]} : vector<8x128xf32> to vector<8x64xf32>
    %305 = vector.extract_strided_slice %292 {offsets = [0, 128], sizes = [8, 64], strides = [1, 1]} : vector<8x192xf32> to vector<8x64xf32>
    %306 = arith.addf %295, %248 : vector<8x64xf32>
    %307 = arith.mulf %303, %306 : vector<8x64xf32>
    %308 = arith.addf %305, %307 : vector<8x64xf32>
    %309 = math.tanh %308 : vector<8x64xf32>
    %310 = arith.subf %291, %309 : vector<8x64xf32>
    %311 = arith.mulf %304, %310 : vector<8x64xf32>
    %312 = arith.addf %309, %311 : vector<8x64xf32>
    %313 = vector.extract_strided_slice %243 {offsets = [24, 0], sizes = [8, 192], strides = [1, 1]} : vector<64x192xf32> to vector<8x192xf32>
    %314 = arith.truncf %312 : vector<8x64xf32> to vector<8x64xbf16>
    %cst_65 = arith.constant dense<0.000000e+00> : vector<8x128xf32>
    %315 = tpu.matmul %314, %244, %cst_65 {dimension_numbers = #tpu.dot_dimension_numbers<[1], [0], [0], [1], [0, 0, 1, 1], [], []>} : vector<8x64xbf16>, vector<64x128xbf16>, vector<8x128xf32> -> vector<8x128xf32>
    %cst_66 = arith.constant dense<0.000000e+00> : vector<8x64xf32>
    %316 = tpu.matmul %314, %245, %cst_66 {dimension_numbers = #tpu.dot_dimension_numbers<[1], [0], [0], [1], [0, 0, 1, 1], [], []>} : vector<8x64xbf16>, vector<64x64xbf16>, vector<8x64xf32> -> vector<8x64xf32>
    %317 = vector.extract_strided_slice %313 {offsets = [0, 0], sizes = [8, 128], strides = [1, 1]} : vector<8x192xf32> to vector<8x128xf32>
    %318 = arith.addf %317, %315 : vector<8x128xf32>
    %319 = arith.negf %318 : vector<8x128xf32>
    %320 = math.exp %319 : vector<8x128xf32>
    %cst_67 = arith.constant 1.000000e+00 : f32
    %321 = vector.broadcast %cst_67 : f32 to vector<8x128xf32>
    %322 = arith.addf %321, %320 : vector<8x128xf32>
    %323 = arith.divf %321, %322 : vector<8x128xf32>
    %324 = vector.extract_strided_slice %323 {offsets = [0, 0], sizes = [8, 64], strides = [1, 1]} : vector<8x128xf32> to vector<8x64xf32>
    %325 = vector.extract_strided_slice %323 {offsets = [0, 64], sizes = [8, 64], strides = [1, 1]} : vector<8x128xf32> to vector<8x64xf32>
    %326 = vector.extract_strided_slice %313 {offsets = [0, 128], sizes = [8, 64], strides = [1, 1]} : vector<8x192xf32> to vector<8x64xf32>
    %327 = arith.addf %316, %248 : vector<8x64xf32>
    %328 = arith.mulf %324, %327 : vector<8x64xf32>
    %329 = arith.addf %326, %328 : vector<8x64xf32>
    %330 = math.tanh %329 : vector<8x64xf32>
    %331 = arith.subf %312, %330 : vector<8x64xf32>
    %332 = arith.mulf %325, %331 : vector<8x64xf32>
    %333 = arith.addf %330, %332 : vector<8x64xf32>
    %334 = vector.extract_strided_slice %243 {offsets = [32, 0], sizes = [8, 192], strides = [1, 1]} : vector<64x192xf32> to vector<8x192xf32>
    %335 = arith.truncf %333 : vector<8x64xf32> to vector<8x64xbf16>
    %cst_68 = arith.constant dense<0.000000e+00> : vector<8x128xf32>
    %336 = tpu.matmul %335, %244, %cst_68 {dimension_numbers = #tpu.dot_dimension_numbers<[1], [0], [0], [1], [0, 0, 1, 1], [], []>} : vector<8x64xbf16>, vector<64x128xbf16>, vector<8x128xf32> -> vector<8x128xf32>
    %cst_69 = arith.constant dense<0.000000e+00> : vector<8x64xf32>
    %337 = tpu.matmul %335, %245, %cst_69 {dimension_numbers = #tpu.dot_dimension_numbers<[1], [0], [0], [1], [0, 0, 1, 1], [], []>} : vector<8x64xbf16>, vector<64x64xbf16>, vector<8x64xf32> -> vector<8x64xf32>
    %338 = vector.extract_strided_slice %334 {offsets = [0, 0], sizes = [8, 128], strides = [1, 1]} : vector<8x192xf32> to vector<8x128xf32>
    %339 = arith.addf %338, %336 : vector<8x128xf32>
    %340 = arith.negf %339 : vector<8x128xf32>
    %341 = math.exp %340 : vector<8x128xf32>
    %cst_70 = arith.constant 1.000000e+00 : f32
    %342 = vector.broadcast %cst_70 : f32 to vector<8x128xf32>
    %343 = arith.addf %342, %341 : vector<8x128xf32>
    %344 = arith.divf %342, %343 : vector<8x128xf32>
    %345 = vector.extract_strided_slice %344 {offsets = [0, 0], sizes = [8, 64], strides = [1, 1]} : vector<8x128xf32> to vector<8x64xf32>
    %346 = vector.extract_strided_slice %344 {offsets = [0, 64], sizes = [8, 64], strides = [1, 1]} : vector<8x128xf32> to vector<8x64xf32>
    %347 = vector.extract_strided_slice %334 {offsets = [0, 128], sizes = [8, 64], strides = [1, 1]} : vector<8x192xf32> to vector<8x64xf32>
    %348 = arith.addf %337, %248 : vector<8x64xf32>
    %349 = arith.mulf %345, %348 : vector<8x64xf32>
    %350 = arith.addf %347, %349 : vector<8x64xf32>
    %351 = math.tanh %350 : vector<8x64xf32>
    %352 = arith.subf %333, %351 : vector<8x64xf32>
    %353 = arith.mulf %346, %352 : vector<8x64xf32>
    %354 = arith.addf %351, %353 : vector<8x64xf32>
    %355 = vector.extract_strided_slice %243 {offsets = [40, 0], sizes = [8, 192], strides = [1, 1]} : vector<64x192xf32> to vector<8x192xf32>
    %356 = arith.truncf %354 : vector<8x64xf32> to vector<8x64xbf16>
    %cst_71 = arith.constant dense<0.000000e+00> : vector<8x128xf32>
    %357 = tpu.matmul %356, %244, %cst_71 {dimension_numbers = #tpu.dot_dimension_numbers<[1], [0], [0], [1], [0, 0, 1, 1], [], []>} : vector<8x64xbf16>, vector<64x128xbf16>, vector<8x128xf32> -> vector<8x128xf32>
    %cst_72 = arith.constant dense<0.000000e+00> : vector<8x64xf32>
    %358 = tpu.matmul %356, %245, %cst_72 {dimension_numbers = #tpu.dot_dimension_numbers<[1], [0], [0], [1], [0, 0, 1, 1], [], []>} : vector<8x64xbf16>, vector<64x64xbf16>, vector<8x64xf32> -> vector<8x64xf32>
    %359 = vector.extract_strided_slice %355 {offsets = [0, 0], sizes = [8, 128], strides = [1, 1]} : vector<8x192xf32> to vector<8x128xf32>
    %360 = arith.addf %359, %357 : vector<8x128xf32>
    %361 = arith.negf %360 : vector<8x128xf32>
    %362 = math.exp %361 : vector<8x128xf32>
    %cst_73 = arith.constant 1.000000e+00 : f32
    %363 = vector.broadcast %cst_73 : f32 to vector<8x128xf32>
    %364 = arith.addf %363, %362 : vector<8x128xf32>
    %365 = arith.divf %363, %364 : vector<8x128xf32>
    %366 = vector.extract_strided_slice %365 {offsets = [0, 0], sizes = [8, 64], strides = [1, 1]} : vector<8x128xf32> to vector<8x64xf32>
    %367 = vector.extract_strided_slice %365 {offsets = [0, 64], sizes = [8, 64], strides = [1, 1]} : vector<8x128xf32> to vector<8x64xf32>
    %368 = vector.extract_strided_slice %355 {offsets = [0, 128], sizes = [8, 64], strides = [1, 1]} : vector<8x192xf32> to vector<8x64xf32>
    %369 = arith.addf %358, %248 : vector<8x64xf32>
    %370 = arith.mulf %366, %369 : vector<8x64xf32>
    %371 = arith.addf %368, %370 : vector<8x64xf32>
    %372 = math.tanh %371 : vector<8x64xf32>
    %373 = arith.subf %354, %372 : vector<8x64xf32>
    %374 = arith.mulf %367, %373 : vector<8x64xf32>
    %375 = arith.addf %372, %374 : vector<8x64xf32>
    %376 = vector.extract_strided_slice %243 {offsets = [48, 0], sizes = [8, 192], strides = [1, 1]} : vector<64x192xf32> to vector<8x192xf32>
    %377 = arith.truncf %375 : vector<8x64xf32> to vector<8x64xbf16>
    %cst_74 = arith.constant dense<0.000000e+00> : vector<8x128xf32>
    %378 = tpu.matmul %377, %244, %cst_74 {dimension_numbers = #tpu.dot_dimension_numbers<[1], [0], [0], [1], [0, 0, 1, 1], [], []>} : vector<8x64xbf16>, vector<64x128xbf16>, vector<8x128xf32> -> vector<8x128xf32>
    %cst_75 = arith.constant dense<0.000000e+00> : vector<8x64xf32>
    %379 = tpu.matmul %377, %245, %cst_75 {dimension_numbers = #tpu.dot_dimension_numbers<[1], [0], [0], [1], [0, 0, 1, 1], [], []>} : vector<8x64xbf16>, vector<64x64xbf16>, vector<8x64xf32> -> vector<8x64xf32>
    %380 = vector.extract_strided_slice %376 {offsets = [0, 0], sizes = [8, 128], strides = [1, 1]} : vector<8x192xf32> to vector<8x128xf32>
    %381 = arith.addf %380, %378 : vector<8x128xf32>
    %382 = arith.negf %381 : vector<8x128xf32>
    %383 = math.exp %382 : vector<8x128xf32>
    %cst_76 = arith.constant 1.000000e+00 : f32
    %384 = vector.broadcast %cst_76 : f32 to vector<8x128xf32>
    %385 = arith.addf %384, %383 : vector<8x128xf32>
    %386 = arith.divf %384, %385 : vector<8x128xf32>
    %387 = vector.extract_strided_slice %386 {offsets = [0, 0], sizes = [8, 64], strides = [1, 1]} : vector<8x128xf32> to vector<8x64xf32>
    %388 = vector.extract_strided_slice %386 {offsets = [0, 64], sizes = [8, 64], strides = [1, 1]} : vector<8x128xf32> to vector<8x64xf32>
    %389 = vector.extract_strided_slice %376 {offsets = [0, 128], sizes = [8, 64], strides = [1, 1]} : vector<8x192xf32> to vector<8x64xf32>
    %390 = arith.addf %379, %248 : vector<8x64xf32>
    %391 = arith.mulf %387, %390 : vector<8x64xf32>
    %392 = arith.addf %389, %391 : vector<8x64xf32>
    %393 = math.tanh %392 : vector<8x64xf32>
    %394 = arith.subf %375, %393 : vector<8x64xf32>
    %395 = arith.mulf %388, %394 : vector<8x64xf32>
    %396 = arith.addf %393, %395 : vector<8x64xf32>
    %397 = vector.extract_strided_slice %243 {offsets = [56, 0], sizes = [8, 192], strides = [1, 1]} : vector<64x192xf32> to vector<8x192xf32>
    %398 = arith.truncf %396 : vector<8x64xf32> to vector<8x64xbf16>
    %cst_77 = arith.constant dense<0.000000e+00> : vector<8x128xf32>
    %399 = tpu.matmul %398, %244, %cst_77 {dimension_numbers = #tpu.dot_dimension_numbers<[1], [0], [0], [1], [0, 0, 1, 1], [], []>} : vector<8x64xbf16>, vector<64x128xbf16>, vector<8x128xf32> -> vector<8x128xf32>
    %cst_78 = arith.constant dense<0.000000e+00> : vector<8x64xf32>
    %400 = tpu.matmul %398, %245, %cst_78 {dimension_numbers = #tpu.dot_dimension_numbers<[1], [0], [0], [1], [0, 0, 1, 1], [], []>} : vector<8x64xbf16>, vector<64x64xbf16>, vector<8x64xf32> -> vector<8x64xf32>
    %401 = vector.extract_strided_slice %397 {offsets = [0, 0], sizes = [8, 128], strides = [1, 1]} : vector<8x192xf32> to vector<8x128xf32>
    %402 = arith.addf %401, %399 : vector<8x128xf32>
    %403 = arith.negf %402 : vector<8x128xf32>
    %404 = math.exp %403 : vector<8x128xf32>
    %cst_79 = arith.constant 1.000000e+00 : f32
    %405 = vector.broadcast %cst_79 : f32 to vector<8x128xf32>
    %406 = arith.addf %405, %404 : vector<8x128xf32>
    %407 = arith.divf %405, %406 : vector<8x128xf32>
    %408 = vector.extract_strided_slice %407 {offsets = [0, 0], sizes = [8, 64], strides = [1, 1]} : vector<8x128xf32> to vector<8x64xf32>
    %409 = vector.extract_strided_slice %407 {offsets = [0, 64], sizes = [8, 64], strides = [1, 1]} : vector<8x128xf32> to vector<8x64xf32>
    %410 = vector.extract_strided_slice %397 {offsets = [0, 128], sizes = [8, 64], strides = [1, 1]} : vector<8x192xf32> to vector<8x64xf32>
    %411 = arith.addf %400, %248 : vector<8x64xf32>
    %412 = arith.mulf %408, %411 : vector<8x64xf32>
    %413 = arith.addf %410, %412 : vector<8x64xf32>
    %414 = math.tanh %413 : vector<8x64xf32>
    %415 = arith.subf %396, %414 : vector<8x64xf32>
    %416 = arith.mulf %409, %415 : vector<8x64xf32>
    %417 = arith.addf %414, %416 : vector<8x64xf32>
    %418 = tpu.concatenate %270, %291, %312, %333, %354, %375, %396, %417 in 0 : vector<8x64xf32>, vector<8x64xf32>, vector<8x64xf32>, vector<8x64xf32>, vector<8x64xf32>, vector<8x64xf32>, vector<8x64xf32>, vector<8x64xf32> -> vector<64x64xf32>
    %419 = tpu.concatenate %417, %396, %375, %354, %333, %312, %291, %270 in 0 : vector<8x64xf32>, vector<8x64xf32>, vector<8x64xf32>, vector<8x64xf32>, vector<8x64xf32>, vector<8x64xf32>, vector<8x64xf32>, vector<8x64xf32> -> vector<64x64xf32>
    %420 = vector.shape_cast %21 : vector<1x64xi1> to vector<1x64xi1>
    %421 = vector.broadcast %420 : vector<1x64xi1> to vector<64x64xi1>
    %422 = arith.select %421, %418, %419 : vector<64x64xi1>, vector<64x64xf32>
    %423 = arith.truncf %422 : vector<64x64xf32> to vector<64x64xbf16>
    %c0_80 = arith.constant 0 : index
    %c0_81 = arith.constant 0 : index
    %424 = vector.load %arg13[%c0_80, %c0_81] : memref<64x64xbf16, #tpu.memory_space<vmem>>, vector<64x64xbf16>
    %cst_82 = arith.constant dense<0.000000e+00> : vector<64x64xf32>
    %425 = tpu.matmul %423, %424, %cst_82 {dimension_numbers = #tpu.dot_dimension_numbers<[1], [0], [0], [1], [0, 0, 1, 1], [], []>} : vector<64x64xbf16>, vector<64x64xbf16>, vector<64x64xf32> -> vector<64x64xf32>
    %c0_83 = arith.constant 0 : index
    %c0_84 = arith.constant 0 : index
    %426 = vector.load %arg14[%c0_83, %c0_84] : memref<1x64xf32, #tpu.memory_space<vmem>>, vector<1x64xf32>
    %427 = vector.broadcast %426 : vector<1x64xf32> to vector<64x64xf32>
    %428 = arith.addf %425, %427 : vector<64x64xf32>
    %429 = math.tanh %428 : vector<64x64xf32>
    %430 = vector.shape_cast %429 : vector<64x64xf32> to vector<8x8x64xf32>
    %431 = vector.shape_cast %422 : vector<64x64xf32> to vector<8x8x64xf32>
    %c0_85 = arith.constant 0 : index
    %c0_86 = arith.constant 0 : index
    %432 = vector.load %arg15[%c0_85, %c0_86] : memref<1x64xf32, #tpu.memory_space<vmem>>, vector<1x64xf32>
    %433 = vector.shape_cast %432 : vector<1x64xf32> to vector<1x1x64xf32>
    %434 = vector.broadcast %433 : vector<1x1x64xf32> to vector<8x8x64xf32>
    %435 = arith.mulf %430, %434 : vector<8x8x64xf32>
    %cst_87 = arith.constant dense<0.000000e+00> : vector<8x8xf32>
    %436 = vector.multi_reduction <add>, %435, %cst_87 [2] : vector<8x8x64xf32> to vector<8x8xf32>
    %437 = vector.shape_cast %436 : vector<8x8xf32> to vector<8x8x1xf32>
    %c0_88 = arith.constant 0 : index
    %c0_89 = arith.constant 0 : index
    %438 = vector.load %arg16[%c0_88, %c0_89] : memref<1x1xf32, #tpu.memory_space<vmem>>, vector<1x1xf32>
    %439 = vector.shape_cast %438 : vector<1x1xf32> to vector<1x1x1xf32>
    %440 = vector.broadcast %439 : vector<1x1x1xf32> to vector<8x8x1xf32>
    %441 = arith.addf %437, %440 : vector<8x8x1xf32>
    %cst_90 = arith.constant dense<0xFF800000> : vector<8x1xf32>
    %442 = vector.multi_reduction <maximumf>, %441, %cst_90 [0] : vector<8x8x1xf32> to vector<8x1xf32>
    %443 = vector.shape_cast %442 : vector<8x1xf32> to vector<1x8x1xf32>
    %444 = vector.broadcast %443 : vector<1x8x1xf32> to vector<8x8x1xf32>
    %445 = arith.subf %441, %444 : vector<8x8x1xf32>
    %446 = math.exp %445 : vector<8x8x1xf32>
    %cst_91 = arith.constant dense<0.000000e+00> : vector<8x1xf32>
    %447 = vector.multi_reduction <add>, %446, %cst_91 [0] : vector<8x8x1xf32> to vector<8x1xf32>
    %448 = vector.broadcast %446 : vector<8x8x1xf32> to vector<8x8x64xf32>
    %449 = arith.mulf %448, %431 : vector<8x8x64xf32>
    %cst_92 = arith.constant dense<0.000000e+00> : vector<8x64xf32>
    %450 = vector.multi_reduction <add>, %449, %cst_92 [0] : vector<8x8x64xf32> to vector<8x64xf32>
    %451 = vector.broadcast %447 : vector<8x1xf32> to vector<8x64xf32>
    %452 = arith.divf %450, %451 : vector<8x64xf32>
    %453 = arith.truncf %452 : vector<8x64xf32> to vector<8x64xbf16>
    %c0_93 = arith.constant 0 : index
    %c0_94 = arith.constant 0 : index
    %454 = vector.load %arg17[%c0_93, %c0_94] : memref<64x64xbf16, #tpu.memory_space<vmem>>, vector<64x64xbf16>
    %cst_95 = arith.constant dense<0.000000e+00> : vector<8x64xf32>
    %455 = tpu.matmul %453, %454, %cst_95 {dimension_numbers = #tpu.dot_dimension_numbers<[1], [0], [0], [1], [0, 0, 1, 1], [], []>} : vector<8x64xbf16>, vector<64x64xbf16>, vector<8x64xf32> -> vector<8x64xf32>
    %c0_96 = arith.constant 0 : index
    %c0_97 = arith.constant 0 : index
    %456 = vector.load %arg18[%c0_96, %c0_97] : memref<1x64xf32, #tpu.memory_space<vmem>>, vector<1x64xf32>
    %457 = vector.broadcast %456 : vector<1x64xf32> to vector<8x64xf32>
    %458 = arith.addf %455, %457 : vector<8x64xf32>
    %cst_98 = arith.constant 0.000000e+00 : f32
    %459 = vector.broadcast %cst_98 : f32 to vector<8x64xf32>
    %460 = arith.maximumf %458, %459 : vector<8x64xf32>
    %461 = arith.truncf %460 : vector<8x64xf32> to vector<8x64xbf16>
    %c0_99 = arith.constant 0 : index
    %c0_100 = arith.constant 0 : index
    %462 = vector.load %arg19[%c0_99, %c0_100] : memref<64x32xbf16, #tpu.memory_space<vmem>>, vector<64x32xbf16>
    %cst_101 = arith.constant dense<0.000000e+00> : vector<8x32xf32>
    %463 = tpu.matmul %461, %462, %cst_101 {dimension_numbers = #tpu.dot_dimension_numbers<[1], [0], [0], [1], [0, 0, 1, 1], [], []>} : vector<8x64xbf16>, vector<64x32xbf16>, vector<8x32xf32> -> vector<8x32xf32>
    %c0_102 = arith.constant 0 : index
    %c0_103 = arith.constant 0 : index
    %464 = vector.load %arg20[%c0_102, %c0_103] : memref<1x32xf32, #tpu.memory_space<vmem>>, vector<1x32xf32>
    %465 = vector.broadcast %464 : vector<1x32xf32> to vector<8x32xf32>
    %466 = arith.addf %463, %465 : vector<8x32xf32>
    %cst_104 = arith.constant 0.000000e+00 : f32
    %467 = vector.broadcast %cst_104 : f32 to vector<8x32xf32>
    %468 = arith.maximumf %466, %467 : vector<8x32xf32>
    %c0_105 = arith.constant 0 : index
    %c0_106 = arith.constant 0 : index
    %469 = vector.load %arg21[%c0_105, %c0_106] : memref<1x32xf32, #tpu.memory_space<vmem>>, vector<1x32xf32>
    %470 = vector.broadcast %469 : vector<1x32xf32> to vector<8x32xf32>
    %471 = arith.mulf %468, %470 : vector<8x32xf32>
    %cst_107 = arith.constant dense<0.000000e+00> : vector<8xf32>
    %472 = vector.multi_reduction <add>, %471, %cst_107 [1] : vector<8x32xf32> to vector<8xf32>
    %473 = vector.shape_cast %472 : vector<8xf32> to vector<8x1xf32>
    %c0_108 = arith.constant 0 : index
    %c0_109 = arith.constant 0 : index
    %474 = vector.load %arg22[%c0_108, %c0_109] : memref<1x1xf32, #tpu.memory_space<vmem>>, vector<1x1xf32>
    %475 = vector.broadcast %474 : vector<1x1xf32> to vector<8x1xf32>
    %476 = arith.addf %473, %475 : vector<8x1xf32>
    %477 = arith.negf %476 : vector<8x1xf32>
    %478 = math.exp %477 : vector<8x1xf32>
    %cst_110 = arith.constant 1.000000e+00 : f32
    %479 = vector.broadcast %cst_110 : f32 to vector<8x1xf32>
    %480 = arith.addf %479, %478 : vector<8x1xf32>
    %481 = arith.divf %479, %480 : vector<8x1xf32>
    %c0_111 = arith.constant 0 : index
    %c0_112 = arith.constant 0 : index
    %482 = vector.load %arg23[%c0_111, %c0_112] : memref<8x1xf32, #tpu.memory_space<vmem>>, vector<8x1xf32>
    tpu.vector_store %arg23[%c0_111, %c0_112], %481 {strides = array<i32>} : memref<8x1xf32, #tpu.memory_space<vmem>>, vector<8x1xf32>,
    return
  }
}

</mosaic_0001>

<llo_original>
// kernel: tpu_custom_call.1
$region0: #{tpu_custom_call.1}
  #allocation0 [shape = 'u32[]', space=smem, size = 0x4, offset = 0x4, fixed_abs, tag = 'smem constant byte address 0x4 - core index']
  #allocation1 [shape = 'u32[72,128]{1,0:T(1,128)}', space=vmem, size = 0x9000, scoped, tag = 'internal scratch']
  #allocation2 [shape = 'f32[1,1]{1,0:T(1,128)S(1)}', space=vmem, size = 0x200, scoped, tag = 'scoped memory for tpu_custom_call.1']
  #allocation3 [shape = 'f32[1,1]{1,0:T(1,128)S(1)}', space=vmem, size = 0x200, scoped, tag = 'scoped memory for tpu_custom_call.1']
  %s0 = inlined_call_operand.vmem [shape: f32[64,9], index: 0, kind: input, shape index: {}]
  %s1 = inlined_call_operand.hbm [shape: f32[1,9], index: 1, kind: input, shape index: {}]
  %s2 = inlined_call_operand.vmem [shape: f32[1,9], index: 2, kind: input, shape index: {}]
  %s3 = inlined_call_operand.vmem [shape: bf16[9,192], index: 3, kind: input, shape index: {}]
  %s4 = inlined_call_operand.vmem [shape: f32[1,192], index: 4, kind: input, shape index: {}]
  %s5 = inlined_call_operand.vmem [shape: bf16[64,128], index: 5, kind: input, shape index: {}]
  %s6 = inlined_call_operand.hbm [shape: bf16[64,64], index: 6, kind: input, shape index: {}]
  %s7 = inlined_call_operand.hbm [shape: f32[1,64], index: 7, kind: input, shape index: {}]
  %s8 = inlined_call_operand.vmem [shape: bf16[64,192], index: 8, kind: input, shape index: {}]
  %s9 = inlined_call_operand.vmem [shape: f32[1,192], index: 9, kind: input, shape index: {}]
  %s10 = inlined_call_operand.hbm [shape: bf16[64,128], index: 10, kind: input, shape index: {}]
  %s11 = inlined_call_operand.hbm [shape: bf16[64,64], index: 11, kind: input, shape index: {}]
  %s12 = inlined_call_operand.hbm [shape: f32[1,64], index: 12, kind: input, shape index: {}]
  %s13 = inlined_call_operand.hbm [shape: bf16[64,64], index: 13, kind: input, shape index: {}]
  %s14 = inlined_call_operand.hbm [shape: f32[1,64], index: 14, kind: input, shape index: {}]
  %s15 = inlined_call_operand.hbm [shape: f32[1,64], index: 15, kind: input, shape index: {}]
  %s16 = inlined_call_operand.<no memory space> [shape: f32[1,1], index: 16, kind: input, shape index: {}]
  %s17 = inlined_call_operand.hbm [shape: bf16[64,64], index: 17, kind: input, shape index: {}]
  %s18 = inlined_call_operand.hbm [shape: f32[1,64], index: 18, kind: input, shape index: {}]
  %s19 = inlined_call_operand.vmem [shape: bf16[64,32], index: 19, kind: input, shape index: {}]
  %s20 = inlined_call_operand.hbm [shape: f32[1,32], index: 20, kind: input, shape index: {}]
  %s21 = inlined_call_operand.vmem [shape: f32[1,32], index: 21, kind: input, shape index: {}]
  %s22 = inlined_call_operand.<no memory space> [shape: f32[1,1], index: 22, kind: input, shape index: {}]
  %s23 = inlined_call_operand.vmem [shape: f32[8,1], index: 23, kind: output, shape index: {}]
  %s24 = sld [smem:[#allocation0]]
  $region150: #{tpu_custom_call.1} parent=0
    _
  %s26 = ssub.s32 1, %s24
  %s27 = scalar_select 0, %s26, %s24
  %v28 = vstv %s16
  %29 = vst [vmem:[#allocation2] sm:$0x1] %v28
  %v30 = vstv %s22
  %31 = vst [vmem:[#allocation3] sm:$0x1] %v30
  $region1: #{tpu_custom_call.1} parent=0
    #allocation4 [shape = 'u8[512]{0}', space=vmem, size = 0x400, scoped, tag = 'input window, operand 1, single buffered']
    #allocation5 [shape = 's32[1]{0}', space=sflag, size = 0x4, scoped, tag = 'scoped memory for tpu_custom_call.1']
    #allocation6 [shape = 'u8[16384]{0}', space=vmem, size = 0x4000, scoped, tag = 'input window, operand 6, single buffered']
    #allocation7 [shape = 's32[1]{0}', space=sflag, size = 0x4, scoped, tag = 'scoped memory for tpu_custom_call.1']
    #allocation8 [shape = 'u8[512]{0}', space=vmem, size = 0x400, scoped, tag = 'input window, operand 7, single buffered']
    #allocation9 [shape = 'u8[16384]{0}', space=vmem, size = 0x4000, scoped, tag = 'input window, operand 10, single buffered']
    #allocation10 [shape = 's32[1]{0}', space=sflag, size = 0x4, scoped, tag = 'scoped memory for tpu_custom_call.1']
    #allocation11 [shape = 'u8[16384]{0}', space=vmem, size = 0x4000, scoped, tag = 'input window, operand 11, single buffered']
    #allocation12 [shape = 'u8[512]{0}', space=vmem, size = 0x400, scoped, tag = 'input window, operand 12, single buffered']
    #allocation13 [shape = 's32[1]{0}', space=sflag, size = 0x4, scoped, tag = 'scoped memory for tpu_custom_call.1']
    #allocation14 [shape = 'u8[16384]{0}', space=vmem, size = 0x4000, scoped, tag = 'input window, operand 13, single buffered']
    #allocation15 [shape = 'u8[512]{0}', space=vmem, size = 0x400, scoped, tag = 'input window, operand 14, single buffered']
    #allocation16 [shape = 's32[1]{0}', space=sflag, size = 0x4, scoped, tag = 'scoped memory for tpu_custom_call.1']
    #allocation17 [shape = 'u8[512]{0}', space=vmem, size = 0x400, scoped, tag = 'input window, operand 15, single buffered']
    #allocation18 [shape = 'u8[16384]{0}', space=vmem, size = 0x4000, scoped, tag = 'input window, operand 17, single buffered']
    #allocation19 [shape = 's32[1]{0}', space=sflag, size = 0x4, scoped, tag = 'scoped memory for tpu_custom_call.1']
    #allocation20 [shape = 'u8[512]{0}', space=vmem, size = 0x400, scoped, tag = 'input window, operand 18, single buffered']
    #allocation21 [shape = 'u8[512]{0}', space=vmem, size = 0x400, scoped, tag = 'input window, operand 20, single buffered']
    #allocation22 [shape = 's32[1]{0}', space=sflag, size = 0x4, scoped, tag = 'scoped memory for tpu_custom_call.1']
    %32 = vsyncpa [#allocation5], 0
    %33 = vsyncpa [#allocation7], 0
    %34 = vsyncpa [#allocation10], 0
    %35 = vsyncpa [#allocation13], 0
    %36 = vsyncpa [#allocation16], 0
    %37 = vsyncpa [#allocation19], 0
    %38 = vsyncpa [#allocation22], 0
    // Predicated region
    $region2: #{tpu_custom_call.1} parent=1 // pred_check
      _
    $region3: #{tpu_custom_call.1} parent=1 // pred_check_branch
      %40 = sbr.rel (0) target = $region5
    $region4: #{tpu_custom_call.1} parent=1 // pred_region
      _
    $region5: #{tpu_custom_call.1} parent=1 // pred_fallthru
      _
    // Predicated region
    $region6: #{tpu_custom_call.1} parent=1 // pred_check
      _
    $region7: #{tpu_custom_call.1} parent=1 // pred_check_branch
      %42 = sbr.rel (0) target = $region9
    $region8: #{tpu_custom_call.1} parent=1 // pred_region
      %44 = vsyncadd [#allocation5], 0
      %s46 = sshll.u32 %s1, 4
      %s47 = int_to_ptr.hbm [resolvable:$true] %s46
      %s48 = sshll.u32 [#allocation4], 4
      %s49 = int_to_ptr.vmem [resolvable:$true] %s48
      %51 = dma.hbm_to_vmem [thread:$0]  %s47, 16, %s49, [#allocation5]
    $region9: #{tpu_custom_call.1} parent=1 // pred_fallthru
      _
    // Predicated region
    $region10: #{tpu_custom_call.1} parent=1 // pred_check
      _
    $region11: #{tpu_custom_call.1} parent=1 // pred_check_branch
      %53 = sbr.rel (0) target = $region13
    $region12: #{tpu_custom_call.1} parent=1 // pred_region
      _
    $region13: #{tpu_custom_call.1} parent=1 // pred_fallthru
      _
    // Predicated region
    $region14: #{tpu_custom_call.1} parent=1 // pred_check
      _
    $region15: #{tpu_custom_call.1} parent=1 // pred_check_branch
      %55 = sbr.rel (0) target = $region17
    $region16: #{tpu_custom_call.1} parent=1 // pred_region
      _
    $region17: #{tpu_custom_call.1} parent=1 // pred_fallthru
      _
    // Predicated region
    $region18: #{tpu_custom_call.1} parent=1 // pred_check
      _
    $region19: #{tpu_custom_call.1} parent=1 // pred_check_branch
      %57 = sbr.rel (0) target = $region21
    $region20: #{tpu_custom_call.1} parent=1 // pred_region
      _
    $region21: #{tpu_custom_call.1} parent=1 // pred_fallthru
      _
    // Predicated region
    $region22: #{tpu_custom_call.1} parent=1 // pred_check
      _
    $region23: #{tpu_custom_call.1} parent=1 // pred_check_branch
      %59 = sbr.rel (0) target = $region25
    $region24: #{tpu_custom_call.1} parent=1 // pred_region
      _
    $region25: #{tpu_custom_call.1} parent=1 // pred_fallthru
      _
    // Predicated region
    $region26: #{tpu_custom_call.1} parent=1 // pred_check
      _
    $region27: #{tpu_custom_call.1} parent=1 // pred_check_branch
      %61 = sbr.rel (0) target = $region29
    $region28: #{tpu_custom_call.1} parent=1 // pred_region
      %63 = vsyncadd [#allocation7], 0
      %s64 = sshll.u32 %s6, 4
      %s65 = int_to_ptr.hbm [resolvable:$true] %s64
      %s66 = sshll.u32 [#allocation6], 4
      %s67 = int_to_ptr.vmem [resolvable:$true] %s66
      %72 = dma.hbm_to_vmem [thread:$0]  %s65, 512, %s67, [#allocation7], 64, 64, 4
    $region29: #{tpu_custom_call.1} parent=1 // pred_fallthru
      _
    // Predicated region
    $region30: #{tpu_custom_call.1} parent=1 // pred_check
      _
    $region31: #{tpu_custom_call.1} parent=1 // pred_check_branch
      %74 = sbr.rel (0) target = $region33
    $region32: #{tpu_custom_call.1} parent=1 // pred_region
      %76 = vsyncadd [#allocation7], 0
      %s78 = sshll.u32 %s7, 4
      %s79 = int_to_ptr.hbm [resolvable:$true] %s78
      %s80 = sshll.u32 [#allocation8], 4
      %s81 = int_to_ptr.vmem [resolvable:$true] %s80
      %83 = dma.hbm_to_vmem [thread:$0]  %s79, 16, %s81, [#allocation7]
    $region33: #{tpu_custom_call.1} parent=1 // pred_fallthru
      _
    // Predicated region
    $region34: #{tpu_custom_call.1} parent=1 // pred_check
      _
    $region35: #{tpu_custom_call.1} parent=1 // pred_check_branch
      %85 = sbr.rel (0) target = $region37
    $region36: #{tpu_custom_call.1} parent=1 // pred_region
      _
    $region37: #{tpu_custom_call.1} parent=1 // pred_fallthru
      _
    // Predicated region
    $region38: #{tpu_custom_call.1} parent=1 // pred_check
      _
    $region39: #{tpu_custom_call.1} parent=1 // pred_check_branch
      %87 = sbr.rel (0) target = $region41
    $region40: #{tpu_custom_call.1} parent=1 // pred_region
      _
    $region41: #{tpu_custom_call.1} parent=1 // pred_fallthru
      _
    // Predicated region
    $region42: #{tpu_custom_call.1} parent=1 // pred_check
      _
    $region43: #{tpu_custom_call.1} parent=1 // pred_check_branch
      %89 = sbr.rel (0) target = $region45
    $region44: #{tpu_custom_call.1} parent=1 // pred_region
      %91 = vsyncadd [#allocation10], 0
      %s92 = sshll.u32 %s10, 4
      %s93 = int_to_ptr.hbm [resolvable:$true] %s92
      %s94 = sshll.u32 [#allocation9], 4
      %s95 = int_to_ptr.vmem [resolvable:$true] %s94
      %100 = dma.hbm_to_vmem [thread:$0]  %s93, 512, %s95, [#allocation10], 64, 64, 4
    $region45: #{tpu_custom_call.1} parent=1 // pred_fallthru
      _
    // Predicated region
    $region46: #{tpu_custom_call.1} parent=1 // pred_check
      _
    $region47: #{tpu_custom_call.1} parent=1 // pred_check_branch
      %102 = sbr.rel (0) target = $region49
    $region48: #{tpu_custom_call.1} parent=1 // pred_region
      %104 = vsyncadd [#allocation10], 0
      %s105 = sshll.u32 %s11, 4
      %s106 = int_to_ptr.hbm [resolvable:$true] %s105
      %s107 = sshll.u32 [#allocation11], 4
      %s108 = int_to_ptr.vmem [resolvable:$true] %s107
      %113 = dma.hbm_to_vmem [thread:$0]  %s106, 512, %s108, [#allocation10], 64, 64, 4
    $region49: #{tpu_custom_call.1} parent=1 // pred_fallthru
      _
    // Predicated region
    $region50: #{tpu_custom_call.1} parent=1 // pred_check
      _
    $region51: #{tpu_custom_call.1} parent=1 // pred_check_branch
      %115 = sbr.rel (0) target = $region53
    $region52: #{tpu_custom_call.1} parent=1 // pred_region
      %117 = vsyncadd [#allocation13], 0
      %s119 = sshll.u32 %s12, 4
      %s120 = int_to_ptr.hbm [resolvable:$true] %s119
      %s121 = sshll.u32 [#allocation12], 4
      %s122 = int_to_ptr.vmem [resolvable:$true] %s121
      %124 = dma.hbm_to_vmem [thread:$0]  %s120, 16, %s122, [#allocation13]
    $region53: #{tpu_custom_call.1} parent=1 // pred_fallthru
      _
    // Predicated region
    $region54: #{tpu_custom_call.1} parent=1 // pred_check
      _
    $region55: #{tpu_custom_call.1} parent=1 // pred_check_branch
      %126 = sbr.rel (0) target = $region57
    $region56: #{tpu_custom_call.1} parent=1 // pred_region
      %128 = vsyncadd [#allocation13], 0
      %s129 = sshll.u32 %s13, 4
      %s130 = int_to_ptr.hbm [resolvable:$true] %s129
      %s131 = sshll.u32 [#allocation14], 4
      %s132 = int_to_ptr.vmem [resolvable:$true] %s131
      %137 = dma.hbm_to_vmem [thread:$0]  %s130, 512, %s132, [#allocation13], 64, 64, 4
    $region57: #{tpu_custom_call.1} parent=1 // pred_fallthru
      _
    // Predicated region
    $region58: #{tpu_custom_call.1} parent=1 // pred_check
      _
    $region59: #{tpu_custom_call.1} parent=1 // pred_check_branch
      %139 = sbr.rel (0) target = $region61
    $region60: #{tpu_custom_call.1} parent=1 // pred_region
      %141 = vsyncadd [#allocation16], 0
      %s143 = sshll.u32 %s14, 4
      %s144 = int_to_ptr.hbm [resolvable:$true] %s143
      %s145 = sshll.u32 [#allocation15], 4
      %s146 = int_to_ptr.vmem [resolvable:$true] %s145
      %148 = dma.hbm_to_vmem [thread:$0]  %s144, 16, %s146, [#allocation16]
    $region61: #{tpu_custom_call.1} parent=1 // pred_fallthru
      _
    // Predicated region
    $region62: #{tpu_custom_call.1} parent=1 // pred_check
      _
    $region63: #{tpu_custom_call.1} parent=1 // pred_check_branch
      %150 = sbr.rel (0) target = $region65
    $region64: #{tpu_custom_call.1} parent=1 // pred_region
      %152 = vsyncadd [#allocation16], 0
      %s154 = sshll.u32 %s15, 4
      %s155 = int_to_ptr.hbm [resolvable:$true] %s154
      %s156 = sshll.u32 [#allocation17], 4
      %s157 = int_to_ptr.vmem [resolvable:$true] %s156
      %159 = dma.hbm_to_vmem [thread:$0]  %s155, 16, %s157, [#allocation16]
    $region65: #{tpu_custom_call.1} parent=1 // pred_fallthru
      _
    // Predicated region
    $region66: #{tpu_custom_call.1} parent=1 // pred_check
      _
    $region67: #{tpu_custom_call.1} parent=1 // pred_check_branch
      %161 = sbr.rel (0) target = $region69
    $region68: #{tpu_custom_call.1} parent=1 // pred_region
      _
    $region69: #{tpu_custom_call.1} parent=1 // pred_fallthru
      _
    // Predicated region
    $region70: #{tpu_custom_call.1} parent=1 // pred_check
      _
    $region71: #{tpu_custom_call.1} parent=1 // pred_check_branch
      %163 = sbr.rel (0) target = $region73
    $region72: #{tpu_custom_call.1} parent=1 // pred_region
      %165 = vsyncadd [#allocation19], 0
      %s166 = sshll.u32 %s17, 4
      %s167 = int_to_ptr.hbm [resolvable:$true] %s166
      %s168 = sshll.u32 [#allocation18], 4
      %s169 = int_to_ptr.vmem [resolvable:$true] %s168
      %174 = dma.hbm_to_vmem [thread:$0]  %s167, 512, %s169, [#allocation19], 64, 64, 4
    $region73: #{tpu_custom_call.1} parent=1 // pred_fallthru
      _
    // Predicated region
    $region74: #{tpu_custom_call.1} parent=1 // pred_check
      _
    $region75: #{tpu_custom_call.1} parent=1 // pred_check_branch
      %176 = sbr.rel (0) target = $region77
    $region76: #{tpu_custom_call.1} parent=1 // pred_region
      %178 = vsyncadd [#allocation19], 0
      %s180 = sshll.u32 %s18, 4
      %s181 = int_to_ptr.hbm [resolvable:$true] %s180
      %s182 = sshll.u32 [#allocation20], 4
      %s183 = int_to_ptr.vmem [resolvable:$true] %s182
      %185 = dma.hbm_to_vmem [thread:$0]  %s181, 16, %s183, [#allocation19]
    $region77: #{tpu_custom_call.1} parent=1 // pred_fallthru
      _
    // Predicated region
    $region78: #{tpu_custom_call.1} parent=1 // pred_check
      _
    $region79: #{tpu_custom_call.1} parent=1 // pred_check_branch
      %187 = sbr.rel (0) target = $region81
    $region80: #{tpu_custom_call.1} parent=1 // pred_region
      _
    $region81: #{tpu_custom_call.1} parent=1 // pred_fallthru
      _
    // Predicated region
    $region82: #{tpu_custom_call.1} parent=1 // pred_check
      _
    $region83: #{tpu_custom_call.1} parent=1 // pred_check_branch
      %189 = sbr.rel (0) target = $region85
    $region84: #{tpu_custom_call.1} parent=1 // pred_region
      %191 = vsyncadd [#allocation22], 0
      %s193 = sshll.u32 %s20, 4
      %s194 = int_to_ptr.hbm [resolvable:$true] %s193
      %s195 = sshll.u32 [#allocation21], 4
      %s196 = int_to_ptr.vmem [resolvable:$true] %s195
      %198 = dma.hbm_to_vmem [thread:$0]  %s194, 16, %s196, [#allocation22]
    $region85: #{tpu_custom_call.1} parent=1 // pred_fallthru
      _
    // Predicated region
    $region86: #{tpu_custom_call.1} parent=1 // pred_check
      _
    $region87: #{tpu_custom_call.1} parent=1 // pred_check_branch
      %200 = sbr.rel (0) target = $region89
    $region88: #{tpu_custom_call.1} parent=1 // pred_region
      _
    $region89: #{tpu_custom_call.1} parent=1 // pred_fallthru
      _
    // Predicated region
    $region90: #{tpu_custom_call.1} parent=1 // pred_check
      _
    $region91: #{tpu_custom_call.1} parent=1 // pred_check_branch
      %202 = sbr.rel (0) target = $region93
    $region92: #{tpu_custom_call.1} parent=1 // pred_region
      _
    $region93: #{tpu_custom_call.1} parent=1 // pred_fallthru
      _
    // Predicated region
    $region94: #{tpu_custom_call.1} parent=1 // pred_check
      _
    $region95: #{tpu_custom_call.1} parent=1 // pred_check_branch
      %204 = sbr.rel (0) target = $region97
    $region96: #{tpu_custom_call.1} parent=1 // pred_region
      %206 = dma.done [#allocation5], 16
    $region97: #{tpu_custom_call.1} parent=1 // pred_fallthru
      _
    // Predicated region
    $region98: #{tpu_custom_call.1} parent=1 // pred_check
      _
    $region99: #{tpu_custom_call.1} parent=1 // pred_check_branch
      %208 = sbr.rel (0) target = $region101
    $region100: #{tpu_custom_call.1} parent=1 // pred_region
      %210 = dma.done [#allocation7], 512
    $region101: #{tpu_custom_call.1} parent=1 // pred_fallthru
      _
    // Predicated region
    $region102: #{tpu_custom_call.1} parent=1 // pred_check
      _
    $region103: #{tpu_custom_call.1} parent=1 // pred_check_branch
      %212 = sbr.rel (0) target = $region105
    $region104: #{tpu_custom_call.1} parent=1 // pred_region
      %214 = dma.done [#allocation7], 16
    $region105: #{tpu_custom_call.1} parent=1 // pred_fallthru
      _
    // Predicated region
    $region106: #{tpu_custom_call.1} parent=1 // pred_check
      _
    $region107: #{tpu_custom_call.1} parent=1 // pred_check_branch
      %216 = sbr.rel (0) target = $region109
    $region108: #{tpu_custom_call.1} parent=1 // pred_region
      %218 = dma.done [#allocation10], 512
    $region109: #{tpu_custom_call.1} parent=1 // pred_fallthru
      _
    // Predicated region
    $region110: #{tpu_custom_call.1} parent=1 // pred_check
      _
    $region111: #{tpu_custom_call.1} parent=1 // pred_check_branch
      %220 = sbr.rel (0) target = $region113
    $region112: #{tpu_custom_call.1} parent=1 // pred_region
      %222 = dma.done [#allocation10], 512
    $region113: #{tpu_custom_call.1} parent=1 // pred_fallthru
      _
    // Predicated region
    $region114: #{tpu_custom_call.1} parent=1 // pred_check
      _
    $region115: #{tpu_custom_call.1} parent=1 // pred_check_branch
      %224 = sbr.rel (0) target = $region117
    $region116: #{tpu_custom_call.1} parent=1 // pred_region
      %226 = dma.done [#allocation13], 16
    $region117: #{tpu_custom_call.1} parent=1 // pred_fallthru
      _
    // Predicated region
    $region118: #{tpu_custom_call.1} parent=1 // pred_check
      _
    $region119: #{tpu_custom_call.1} parent=1 // pred_check_branch
      %228 = sbr.rel (0) target = $region121
    $region120: #{tpu_custom_call.1} parent=1 // pred_region
      %230 = dma.done [#allocation13], 512
    $region121: #{tpu_custom_call.1} parent=1 // pred_fallthru
      _
    // Predicated region
    $region122: #{tpu_custom_call.1} parent=1 // pred_check
      _
    $region123: #{tpu_custom_call.1} parent=1 // pred_check_branch
      %232 = sbr.rel (0) target = $region125
    $region124: #{tpu_custom_call.1} parent=1 // pred_region
      %234 = dma.done [#allocation16], 16
    $region125: #{tpu_custom_call.1} parent=1 // pred_fallthru
      _
    // Predicated region
    $region126: #{tpu_custom_call.1} parent=1 // pred_check
      _
    $region127: #{tpu_custom_call.1} parent=1 // pred_check_branch
      %236 = sbr.rel (0) target = $region129
    $region128: #{tpu_custom_call.1} parent=1 // pred_region
      %238 = dma.done [#allocation16], 16
    $region129: #{tpu_custom_call.1} parent=1 // pred_fallthru
      _
    // Predicated region
    $region130: #{tpu_custom_call.1} parent=1 // pred_check
      _
    $region131: #{tpu_custom_call.1} parent=1 // pred_check_branch
      %240 = sbr.rel (0) target = $region133
    $region132: #{tpu_custom_call.1} parent=1 // pred_region
      %242 = dma.done [#allocation19], 512
    $region133: #{tpu_custom_call.1} parent=1 // pred_fallthru
      _
    // Predicated region
    $region134: #{tpu_custom_call.1} parent=1 // pred_check
      _
    $region135: #{tpu_custom_call.1} parent=1 // pred_check_branch
      %244 = sbr.rel (0) target = $region137
    $region136: #{tpu_custom_call.1} parent=1 // pred_region
      %246 = dma.done [#allocation19], 16
    $region137: #{tpu_custom_call.1} parent=1 // pred_fallthru
      _
    // Predicated region
    $region138: #{tpu_custom_call.1} parent=1 // pred_check
      _
    $region139: #{tpu_custom_call.1} parent=1 // pred_check_branch
      %248 = sbr.rel (0) target = $region141
    $region140: #{tpu_custom_call.1} parent=1 // pred_region
      %250 = dma.done [#allocation22], 16
    $region141: #{tpu_custom_call.1} parent=1 // pred_fallthru
      _
    %v252 = vlaneseq
    %v253 = vand.u32 %v252, 127
    %v254 = vadd.s32 %v253, 128
    %vm255 = vcmp.lt.s32.totalorder %v253, 0
    %v256 = vsub.s32 0, %v253
    %v257 = vsel %vm255, %v256, %v253
    %v258 = vshrl.u32 %v257, 6
    %v259 = vand.u32 %v257, 63
    %v260 = vsub.s32 0, %v259
    %v261 = vsel %vm255, %v260, %v259
    %vm262 = vcmp.lt.s32.totalorder %v254, 0
    %v263 = vsub.s32 0, %v254
    %v264 = vsel %vm262, %v263, %v254
    %v265 = vshrl.u32 %v264, 6
    %v266 = vand.u32 %v264, 63
    %v267 = vsub.s32 0, %v266
    %v268 = vsel %vm262, %v267, %v266
    %vm269 = vcmp.ne.s32.totalorder %v261, 0
    %vm270 = vcmp.ne.s32.totalorder %v268, 0
    %vm271 = vcmp.lt.s32.totalorder %v261, 0
    %vm272 = vcmp.lt.s32.totalorder %v268, 0
    %vm273 = vmand %vm271, %vm269
    %vm274 = vmand %vm272, %vm270
    %v275 = vadd.s32 %v261, 64
    %v276 = vadd.s32 %v268, 64
    %v277 = vsel %vm273, %v275, %v261
    %v278 = vsel %vm274, %v276, %v268
    %vm279 = vcmp.lt.s32.totalorder %v277, 32
    %vm280 = vcmp.lt.s32.totalorder %v278, 32
    %vm281 = vcmp.lt.s32.totalorder %v253, 32
    %v282 = vld [vmem:[%s0] sm:$0xff]
    %v283 = vld [vmem:[%s0 + $0x8] sm:$0xff]
    %v284 = vld [vmem:[%s0 + $0x10] sm:$0xff]
    %v285 = vld [vmem:[%s0 + $0x18] sm:$0xff]
    %v286 = vld [vmem:[%s0 + $0x20] sm:$0xff]
    %v287 = vld [vmem:[%s0 + $0x28] sm:$0xff]
    %v288 = vld [vmem:[%s0 + $0x30] sm:$0xff]
    %v289 = vld [vmem:[%s0 + $0x38] sm:$0xff]
    %v290 = vld [vmem:[#allocation4] sm:$0x1]
    %v292 = vperm.slane %v290, 0
    %v294 = vmul.f32 %v282, %v292
    %v295 = vmul.f32 %v283, %v292
    %v296 = vmul.f32 %v284, %v292
    %v297 = vmul.f32 %v285, %v292
    %v298 = vmul.f32 %v286, %v292
    %v299 = vmul.f32 %v287, %v292
    %v300 = vmul.f32 %v288, %v292
    %v301 = vmul.f32 %v289, %v292
    %v302 = vld [vmem:[%s2] sm:$0x1]
    %v304 = vperm.slane %v302, 0
    %v306 = vadd.f32 %v294, %v304
    %v307 = vadd.f32 %v295, %v304
    %v308 = vadd.f32 %v296, %v304
    %v309 = vadd.f32 %v297, %v304
    %v310 = vadd.f32 %v298, %v304
    %v311 = vadd.f32 %v299, %v304
    %v312 = vadd.f32 %v300, %v304
    %v313 = vadd.f32 %v301, %v304
    %v314 = vpack.c.bf16 %v307, %v306
    %v315 = vpack.c.bf16 %v309, %v308
    %v316 = vpack.c.bf16 %v311, %v310
    %v317 = vpack.c.bf16 %v313, %v312
    %v318 = vld [vmem:[%s3] sm:$0xff]
    %v319 = vld [vmem:[%s3 + $0x8] sm:$0x11]
    %v320 = vld [vmem:[%s4] sm:$0x3]
    %v322 = vperm.slane %v320, 0
    %v323 = vperm.slane %v320, 1
    %v328 = vunpack.c.l.b16 %v318
    %v329 = vunpack.c.h.b16 %v318
    %v330 = vunpack.c.l.b16 %v319
    %v331 = vunpack.c.h.b16 %v319
    %v332 = vpack.c.b16 %v330, %v328
    %v333 = vpack.c.b16 %v331, %v329
    %vm334 = vcmask 72704
    %v336 = vsel %vm334, %v314, 0
    %v339 = vsel %vm334, %v315, 0
    %v342 = vsel %vm334, %v316, 0
    %v345 = vsel %vm334, %v317, 0
    %vm347 = vcmask 1043456
    %vm348 = vcmask 1044480
    %v349 = vsel %vm347, 4294967295, 65535
    %v350 = vsel %vm348, %v349, 0
    %v352 = vand.u32 %v332, %v350
    %v355 = vand.u32 %v333, %v350
    %357 = vmatpush.bf16.msra.mxu0 0
    %358 = vmatpush.bf16.msra.mxu0 0
    %359 = vmatpush.bf16.msra.mxu0 0
    %360 = vmatpush.bf16.msra.mxu0 0
    %361 = vmatpush.bf16.msra.mxu0 0
    %362 = vmatpush.bf16.msra.mxu0 0
    %363 = vmatpush.bf16.msra.mxu0 0
    %364 = vmatpush.bf16.msra.mxu0 %v352
    %365 = vmatmul.bf16.gmra.mxu0 %v336
    %v366 = vpop.f32.mrf.mxu0
    %v367 = vadd.f32 %v322, %v366
    %v368 = vpop.f32.mrf.mxu0
    %v369 = vadd.f32 %v322, %v368
    %370 = vmatmul.bf16.gmra.mxu0 %v339
    %v371 = vpop.f32.mrf.mxu0
    %v372 = vadd.f32 %v322, %v371
    %v373 = vpop.f32.mrf.mxu0
    %v374 = vadd.f32 %v322, %v373
    %375 = vmatmul.bf16.gmra.mxu0 %v342
    %v376 = vpop.f32.mrf.mxu0
    %v377 = vadd.f32 %v322, %v376
    %v378 = vpop.f32.mrf.mxu0
    %v379 = vadd.f32 %v322, %v378
    %380 = vmatmul.bf16.gmra.mxu0 %v345
    %v381 = vpop.f32.mrf.mxu0
    %v382 = vadd.f32 %v322, %v381
    %v383 = vpop.f32.mrf.mxu0
    %v384 = vadd.f32 %v322, %v383
    %385 = vdwg.mxu0
    %386 = vmatpush.bf16.msra.mxu0 0
    %387 = vmatpush.bf16.msra.mxu0 0
    %388 = vmatpush.bf16.msra.mxu0 0
    %389 = vmatpush.bf16.msra.mxu0 0
    %390 = vmatpush.bf16.msra.mxu0 0
    %391 = vmatpush.bf16.msra.mxu0 0
    %392 = vmatpush.bf16.msra.mxu0 0
    %393 = vmatpush.bf16.msra.mxu0 %v355
    %394 = vmatmul.bf16.gmra.mxu0 %v336
    %v395 = vpop.f32.mrf.mxu0
    %v396 = vadd.f32 %v323, %v395
    %v397 = vpop.f32.mrf.mxu0
    %v398 = vadd.f32 %v323, %v397
    %399 = vmatmul.bf16.gmra.mxu0 %v339
    %v400 = vpop.f32.mrf.mxu0
    %v401 = vadd.f32 %v323, %v400
    %v402 = vpop.f32.mrf.mxu0
    %v403 = vadd.f32 %v323, %v402
    %404 = vmatmul.bf16.gmra.mxu0 %v342
    %v405 = vpop.f32.mrf.mxu0
    %v406 = vadd.f32 %v323, %v405
    %v407 = vpop.f32.mrf.mxu0
    %v408 = vadd.f32 %v323, %v407
    %409 = vmatmul.bf16.gmra.mxu0 %v345
    %v410 = vpop.f32.mrf.mxu0
    %v411 = vadd.f32 %v323, %v410
    %v412 = vpop.f32.mrf.mxu0
    %v413 = vadd.f32 %v323, %v412
    %414 = vdwg.mxu0
    %v415 = vsel %vm279, 1, 0
    %v416 = vsel %vm280, 1, 0
    %vm417 = vcmp.eq.s32.totalorder %v415, 1
    %vm418 = vcmp.eq.s32.totalorder %v416, 1
    %v419 = vsel %vm417, %v367, %v384
    %v420 = vsel %vm418, %v396, %v413
    %v421 = vsel %vm417, %v369, %v382
    %v422 = vsel %vm418, %v398, %v411
    %v423 = vsel %vm417, %v372, %v379
    %v424 = vsel %vm418, %v401, %v408
    %v425 = vsel %vm417, %v374, %v377
    %v426 = vsel %vm418, %v403, %v406
    %v427 = vsel %vm417, %v377, %v374
    %v428 = vsel %vm418, %v406, %v403
    %v429 = vsel %vm417, %v379, %v372
    %v430 = vsel %vm418, %v408, %v401
    %v431 = vsel %vm417, %v382, %v369
    %v432 = vsel %vm418, %v411, %v398
    %v433 = vsel %vm417, %v384, %v367
    %v434 = vsel %vm418, %v413, %v396
    %v435 = vld [vmem:[%s5] sm:$0xf]
    %v436 = vld [vmem:[%s5 + $0x4] sm:$0xf]
    %v437 = vld [vmem:[%s5 + $0x8] sm:$0xf]
    %v438 = vld [vmem:[%s5 + $0xc] sm:$0xf]
    %v439 = vld [vmem:[%s5 + $0x10] sm:$0xf]
    %v440 = vld [vmem:[%s5 + $0x14] sm:$0xf]
    %v441 = vld [vmem:[%s5 + $0x18] sm:$0xf]
    %v442 = vld [vmem:[%s5 + $0x1c] sm:$0xf]
    %v443 = vld [vmem:[#allocation6] sm:$0xf]
    %v444 = vld [vmem:[#allocation6 + $0x4] sm:$0xf]
    %v445 = vld [vmem:[#allocation6 + $0x8] sm:$0xf]
    %v446 = vld [vmem:[#allocation6 + $0xc] sm:$0xf]
    %v447 = vld [vmem:[#allocation6 + $0x10] sm:$0xf]
    %v448 = vld [vmem:[#allocation6 + $0x14] sm:$0xf]
    %v449 = vld [vmem:[#allocation6 + $0x18] sm:$0xf]
    %v450 = vld [vmem:[#allocation6 + $0x1c] sm:$0xf]
    %v451 = vld [vmem:[#allocation8] sm:$0x1]
    %v453 = vperm.slane %v451, 0
    %v463 = vunpack.c.l.b16 %v435
    %v464 = vunpack.c.l.b16 %v436
    %v465 = vunpack.c.l.b16 %v437
    %v466 = vunpack.c.l.b16 %v438
    %v467 = vunpack.c.l.b16 %v439
    %v468 = vunpack.c.l.b16 %v440
    %v469 = vunpack.c.l.b16 %v441
    %v470 = vunpack.c.l.b16 %v442
    %v471 = vpack.c.b16 %v464, %v463
    %v472 = vpack.c.b16 %v466, %v465
    %v473 = vpack.c.b16 %v468, %v467
    %v474 = vpack.c.b16 %v470, %v469
    %vm479 = vcmask 523264
    %v481 = vsel %vm479, 0, 0
    %483 = vmatpush.bf16.msra.mxu0 0
    %484 = vmatpush.bf16.msra.mxu0 0
    %485 = vmatpush.bf16.msra.mxu0 0
    %486 = vmatpush.bf16.msra.mxu0 0
    %487 = vmatpush.bf16.msra.mxu0 %v474
    %488 = vmatpush.bf16.msra.mxu0 %v473
    %489 = vmatpush.bf16.msra.mxu0 %v472
    %490 = vmatpush.bf16.msra.mxu0 %v471
    %491 = vmatmul.bf16.gmra.mxu0 %v481
    %v492 = vpop.f32.mrf.mxu0
    %v493 = vadd.f32 0.0, %v492
    %v494 = vpop.f32.mrf.mxu0
    %495 = vdwg.mxu0
    %v496 = vadd.f32 %v419, %v493
    %v497 = vxor.u32 %v496, 2147483648
    %v498 = vmul.f32 %v497, 1.442695
    %v499 = vpow.pop %v498
    %v500 = vadd.f32 %v499, 1.0
    %v501 = vrcp.pop %v500
    %v502 = vmul.f32 %v500, %v501
    %v503 = vsub.f32 1.0, %v502
    %v504 = vmul.f32 %v501, %v503
    %v505 = vadd.f32 %v501, %v504
    %vm506 = vweird.f32 %v500
    %vm507 = vweird.f32 %v501
    %vm508 = vmor %vm506, %vm507
    %v509 = vsel %vm508, %v501, %v505
    %v510 = vand.u32 2147483647, %v500
    %vm511 = vcmp.eq.f32.partialorder %v510, 8.507059e+37
    %v512 = vand.u32 %v500, 2147483648
    %v513 = vor.u32 1.1754944e-38, %v512
    %v514 = vsel %vm511, %v513, %v509
    %v515 = vmul.f32 1.0, %v514
    %v524 = vunpack.c.l.b16 %v443
    %v525 = vunpack.c.l.b16 %v444
    %v526 = vunpack.c.l.b16 %v445
    %v527 = vunpack.c.l.b16 %v446
    %v528 = vunpack.c.l.b16 %v447
    %v529 = vunpack.c.l.b16 %v448
    %v530 = vunpack.c.l.b16 %v449
    %v531 = vunpack.c.l.b16 %v450
    %v532 = vpack.c.b16 %v525, %v524
    %v533 = vpack.c.b16 %v527, %v526
    %v534 = vpack.c.b16 %v529, %v528
    %v535 = vpack.c.b16 %v531, %v530
    %540 = vmatpush.bf16.msra.mxu0 0
    %541 = vmatpush.bf16.msra.mxu0 0
    %542 = vmatpush.bf16.msra.mxu0 0
    %543 = vmatpush.bf16.msra.mxu0 0
    %544 = vmatpush.bf16.msra.mxu0 %v535
    %545 = vmatpush.bf16.msra.mxu0 %v534
    %546 = vmatpush.bf16.msra.mxu0 %v533
    %547 = vmatpush.bf16.msra.mxu0 %v532
    %548 = vmatmul.bf16.gmra.mxu0 %v481
    %v549 = vpop.f32.mrf.mxu0
    %v550 = vadd.f32 %v453, %v549
    %v551 = vpop.f32.mrf.mxu0
    %552 = vdwg.mxu0
    %v553 = vmul.f32 %v515, %v550
    %v554 = vadd.f32 %v420, %v553
    %v555 = vtanh.pop %v554
    %v556 = vsub.f32 0.0, %v555
    %558 = vrot.lane.b32.xlu0 %v556, 64
    %v559 = vpop.permute.xlu0 %558
    %v561 = vmul.f32 %v515, %v559
    %563 = vrot.lane.b32.xlu0 %v561, 64
    %v564 = vpop.permute.xlu0 %563
    %v566 = vadd.f32 %v555, %v564
    %v567 = vpack.c.bf16 %v566, %v566
    %v569 = vsel %vm479, %v567, 0
    %571 = vmatpush.bf16.msra.mxu0 0
    %572 = vmatpush.bf16.msra.mxu0 0
    %573 = vmatpush.bf16.msra.mxu0 0
    %574 = vmatpush.bf16.msra.mxu0 0
    %575 = vmatpush.bf16.msra.mxu0 %v474
    %576 = vmatpush.bf16.msra.mxu0 %v473
    %577 = vmatpush.bf16.msra.mxu0 %v472
    %578 = vmatpush.bf16.msra.mxu0 %v471
    %579 = vmatmul.bf16.gmra.mxu0 %v569
    %v580 = vpop.f32.mrf.mxu0
    %v581 = vadd.f32 0.0, %v580
    %v582 = vpop.f32.mrf.mxu0
    %583 = vdwg.mxu0
    %v584 = vadd.f32 %v421, %v581
    %v585 = vxor.u32 %v584, 2147483648
    %v586 = vmul.f32 %v585, 1.442695
    %v587 = vpow.pop %v586
    %v588 = vadd.f32 %v587, 1.0
    %v589 = vrcp.pop %v588
    %v590 = vmul.f32 %v588, %v589
    %v591 = vsub.f32 1.0, %v590
    %v592 = vmul.f32 %v589, %v591
    %v593 = vadd.f32 %v589, %v592
    %vm594 = vweird.f32 %v588
    %vm595 = vweird.f32 %v589
    %vm596 = vmor %vm594, %vm595
    %v597 = vsel %vm596, %v589, %v593
    %v598 = vand.u32 2147483647, %v588
    %vm599 = vcmp.eq.f32.partialorder %v598, 8.507059e+37
    %v600 = vand.u32 %v588, 2147483648
    %v601 = vor.u32 1.1754944e-38, %v600
    %v602 = vsel %vm599, %v601, %v597
    %v603 = vmul.f32 1.0, %v602
    %604 = vmatpush.bf16.msra.mxu0 0
    %605 = vmatpush.bf16.msra.mxu0 0
    %606 = vmatpush.bf16.msra.mxu0 0
    %607 = vmatpush.bf16.msra.mxu0 0
    %608 = vmatpush.bf16.msra.mxu0 %v535
    %609 = vmatpush.bf16.msra.mxu0 %v534
    %610 = vmatpush.bf16.msra.mxu0 %v533
    %611 = vmatpush.bf16.msra.mxu0 %v532
    %612 = vmatmul.bf16.gmra.mxu0 %v569
    %v613 = vpop.f32.mrf.mxu0
    %v614 = vadd.f32 %v453, %v613
    %v615 = vpop.f32.mrf.mxu0
    %616 = vdwg.mxu0
    %v617 = vmul.f32 %v603, %v614
    %v618 = vadd.f32 %v422, %v617
    %v619 = vtanh.pop %v618
    %v620 = vsub.f32 %v566, %v619
    %622 = vrot.lane.b32.xlu0 %v620, 64
    %v623 = vpop.permute.xlu0 %622
    %v625 = vmul.f32 %v603, %v623
    %627 = vrot.lane.b32.xlu0 %v625, 64
    %v628 = vpop.permute.xlu0 %627
    %v630 = vadd.f32 %v619, %v628
    %v631 = vpack.c.bf16 %v630, %v630
    %v633 = vsel %vm479, %v631, 0
    %635 = vmatpush.bf16.msra.mxu0 0
    %636 = vmatpush.bf16.msra.mxu0 0
    %637 = vmatpush.bf16.msra.mxu0 0
    %638 = vmatpush.bf16.msra.mxu0 0
    %639 = vmatpush.bf16.msra.mxu0 %v474
    %640 = vmatpush.bf16.msra.mxu0 %v473
    %641 = vmatpush.bf16.msra.mxu0 %v472
    %642 = vmatpush.bf16.msra.mxu0 %v471
    %643 = vmatmul.bf16.gmra.mxu0 %v633
    %v644 = vpop.f32.mrf.mxu0
    %v645 = vadd.f32 0.0, %v644
    %v646 = vpop.f32.mrf.mxu0
    %647 = vdwg.mxu0
    %v648 = vadd.f32 %v423, %v645
    %v649 = vxor.u32 %v648, 2147483648
    %v650 = vmul.f32 %v649, 1.442695
    %v651 = vpow.pop %v650
    %v652 = vadd.f32 %v651, 1.0
    %v653 = vrcp.pop %v652
    %v654 = vmul.f32 %v652, %v653
    %v655 = vsub.f32 1.0, %v654
    %v656 = vmul.f32 %v653, %v655
    %v657 = vadd.f32 %v653, %v656
    %vm658 = vweird.f32 %v652
    %vm659 = vweird.f32 %v653
    %vm660 = vmor %vm658, %vm659
    %v661 = vsel %vm660, %v653, %v657
    %v662 = vand.u32 2147483647, %v652
    %vm663 = vcmp.eq.f32.partialorder %v662, 8.507059e+37
    %v664 = vand.u32 %v652, 2147483648
    %v665 = vor.u32 1.1754944e-38, %v664
    %v666 = vsel %vm663, %v665, %v661
    %v667 = vmul.f32 1.0, %v666
    %668 = vmatpush.bf16.msra.mxu0 0
    %669 = vmatpush.bf16.msra.mxu0 0
    %670 = vmatpush.bf16.msra.mxu0 0
    %671 = vmatpush.bf16.msra.mxu0 0
    %672 = vmatpush.bf16.msra.mxu0 %v535
    %673 = vmatpush.bf16.msra.mxu0 %v534
    %674 = vmatpush.bf16.msra.mxu0 %v533
    %675 = vmatpush.bf16.msra.mxu0 %v532
    %676 = vmatmul.bf16.gmra.mxu0 %v633
    %v677 = vpop.f32.mrf.mxu0
    %v678 = vadd.f32 %v453, %v677
    %v679 = vpop.f32.mrf.mxu0
    %680 = vdwg.mxu0
    %v681 = vmul.f32 %v667, %v678
    %v682 = vadd.f32 %v424, %v681
    %v683 = vtanh.pop %v682
    %v684 = vsub.f32 %v630, %v683
    %686 = vrot.lane.b32.xlu0 %v684, 64
    %v687 = vpop.permute.xlu0 %686
    %v689 = vmul.f32 %v667, %v687
    %691 = vrot.lane.b32.xlu0 %v689, 64
    %v692 = vpop.permute.xlu0 %691
    %v694 = vadd.f32 %v683, %v692
    %v695 = vpack.c.bf16 %v694, %v694
    %v697 = vsel %vm479, %v695, 0
    %699 = vmatpush.bf16.msra.mxu0 0
    %700 = vmatpush.bf16.msra.mxu0 0
    %701 = vmatpush.bf16.msra.mxu0 0
    %702 = vmatpush.bf16.msra.mxu0 0
    %703 = vmatpush.bf16.msra.mxu0 %v474
    %704 = vmatpush.bf16.msra.mxu0 %v473
    %705 = vmatpush.bf16.msra.mxu0 %v472
    %706 = vmatpush.bf16.msra.mxu0 %v471
    %707 = vmatmul.bf16.gmra.mxu0 %v697
    %v708 = vpop.f32.mrf.mxu0
    %v709 = vadd.f32 0.0, %v708
    %v710 = vpop.f32.mrf.mxu0
    %711 = vdwg.mxu0
    %v712 = vadd.f32 %v425, %v709
    %v713 = vxor.u32 %v712, 2147483648
    %v714 = vmul.f32 %v713, 1.442695
    %v715 = vpow.pop %v714
    %v716 = vadd.f32 %v715, 1.0
    %v717 = vrcp.pop %v716
    %v718 = vmul.f32 %v716, %v717
    %v719 = vsub.f32 1.0, %v718
    %v720 = vmul.f32 %v717, %v719
    %v721 = vadd.f32 %v717, %v720
    %vm722 = vweird.f32 %v716
    %vm723 = vweird.f32 %v717
    %vm724 = vmor %vm722, %vm723
    %v725 = vsel %vm724, %v717, %v721
    %v726 = vand.u32 2147483647, %v716
    %vm727 = vcmp.eq.f32.partialorder %v726, 8.507059e+37
    %v728 = vand.u32 %v716, 2147483648
    %v729 = vor.u32 1.1754944e-38, %v728
    %v730 = vsel %vm727, %v729, %v725
    %v731 = vmul.f32 1.0, %v730
    %732 = vmatpush.bf16.msra.mxu0 0
    %733 = vmatpush.bf16.msra.mxu0 0
    %734 = vmatpush.bf16.msra.mxu0 0
    %735 = vmatpush.bf16.msra.mxu0 0
    %736 = vmatpush.bf16.msra.mxu0 %v535
    %737 = vmatpush.bf16.msra.mxu0 %v534
    %738 = vmatpush.bf16.msra.mxu0 %v533
    %739 = vmatpush.bf16.msra.mxu0 %v532
    %740 = vmatmul.bf16.gmra.mxu0 %v697
    %v741 = vpop.f32.mrf.mxu0
    %v742 = vadd.f32 %v453, %v741
    %v743 = vpop.f32.mrf.mxu0
    %744 = vdwg.mxu0
    %v745 = vmul.f32 %v731, %v742
    %v746 = vadd.f32 %v426, %v745
    %v747 = vtanh.pop %v746
    %v748 = vsub.f32 %v694, %v747
    %750 = vrot.lane.b32.xlu0 %v748, 64
    %v751 = vpop.permute.xlu0 %750
    %v753 = vmul.f32 %v731, %v751
    %755 = vrot.lane.b32.xlu0 %v753, 64
    %v756 = vpop.permute.xlu0 %755
    %v758 = vadd.f32 %v747, %v756
    %v759 = vpack.c.bf16 %v758, %v758
    %v761 = vsel %vm479, %v759, 0
    %763 = vmatpush.bf16.msra.mxu0 0
    %764 = vmatpush.bf16.msra.mxu0 0
    %765 = vmatpush.bf16.msra.mxu0 0
    %766 = vmatpush.bf16.msra.mxu0 0
    %767 = vmatpush.bf16.msra.mxu0 %v474
    %768 = vmatpush.bf16.msra.mxu0 %v473
    %769 = vmatpush.bf16.msra.mxu0 %v472
    %770 = vmatpush.bf16.msra.mxu0 %v471
    %771 = vmatmul.bf16.gmra.mxu0 %v761
    %v772 = vpop.f32.mrf.mxu0
    %v773 = vadd.f32 0.0, %v772
    %v774 = vpop.f32.mrf.mxu0
    %775 = vdwg.mxu0
    %v776 = vadd.f32 %v427, %v773
    %v777 = vxor.u32 %v776, 2147483648
    %v778 = vmul.f32 %v777, 1.442695
    %v779 = vpow.pop %v778
    %v780 = vadd.f32 %v779, 1.0
    %v781 = vrcp.pop %v780
    %v782 = vmul.f32 %v780, %v781
    %v783 = vsub.f32 1.0, %v782
    %v784 = vmul.f32 %v781, %v783
    %v785 = vadd.f32 %v781, %v784
    %vm786 = vweird.f32 %v780
    %vm787 = vweird.f32 %v781
    %vm788 = vmor %vm786, %vm787
    %v789 = vsel %vm788, %v781, %v785
    %v790 = vand.u32 2147483647, %v780
    %vm791 = vcmp.eq.f32.partialorder %v790, 8.507059e+37
    %v792 = vand.u32 %v780, 2147483648
    %v793 = vor.u32 1.1754944e-38, %v792
    %v794 = vsel %vm791, %v793, %v789
    %v795 = vmul.f32 1.0, %v794
    %796 = vmatpush.bf16.msra.mxu0 0
    %797 = vmatpush.bf16.msra.mxu0 0
    %798 = vmatpush.bf16.msra.mxu0 0
    %799 = vmatpush.bf16.msra.mxu0 0
    %800 = vmatpush.bf16.msra.mxu0 %v535
    %801 = vmatpush.bf16.msra.mxu0 %v534
    %802 = vmatpush.bf16.msra.mxu0 %v533
    %803 = vmatpush.bf16.msra.mxu0 %v532
    %804 = vmatmul.bf16.gmra.mxu0 %v761
    %v805 = vpop.f32.mrf.mxu0
    %v806 = vadd.f32 %v453, %v805
    %v807 = vpop.f32.mrf.mxu0
    %808 = vdwg.mxu0
    %v809 = vmul.f32 %v795, %v806
    %v810 = vadd.f32 %v428, %v809
    %v811 = vtanh.pop %v810
    %v812 = vsub.f32 %v758, %v811
    %814 = vrot.lane.b32.xlu0 %v812, 64
    %v815 = vpop.permute.xlu0 %814
    %v817 = vmul.f32 %v795, %v815
    %819 = vrot.lane.b32.xlu0 %v817, 64
    %v820 = vpop.permute.xlu0 %819
    %v822 = vadd.f32 %v811, %v820
    %v823 = vpack.c.bf16 %v822, %v822
    %v825 = vsel %vm479, %v823, 0
    %827 = vmatpush.bf16.msra.mxu0 0
    %828 = vmatpush.bf16.msra.mxu0 0
    %829 = vmatpush.bf16.msra.mxu0 0
    %830 = vmatpush.bf16.msra.mxu0 0
    %831 = vmatpush.bf16.msra.mxu0 %v474
    %832 = vmatpush.bf16.msra.mxu0 %v473
    %833 = vmatpush.bf16.msra.mxu0 %v472
    %834 = vmatpush.bf16.msra.mxu0 %v471
    %835 = vmatmul.bf16.gmra.mxu0 %v825
    %v836 = vpop.f32.mrf.mxu0
    %v837 = vadd.f32 0.0, %v836
    %v838 = vpop.f32.mrf.mxu0
    %839 = vdwg.mxu0
    %v840 = vadd.f32 %v429, %v837
    %v841 = vxor.u32 %v840, 2147483648
    %v842 = vmul.f32 %v841, 1.442695
    %v843 = vpow.pop %v842
    %v844 = vadd.f32 %v843, 1.0
    %v845 = vrcp.pop %v844
    %v846 = vmul.f32 %v844, %v845
    %v847 = vsub.f32 1.0, %v846
    %v848 = vmul.f32 %v845, %v847
    %v849 = vadd.f32 %v845, %v848
    %vm850 = vweird.f32 %v844
    %vm851 = vweird.f32 %v845
    %vm852 = vmor %vm850, %vm851
    %v853 = vsel %vm852, %v845, %v849
    %v854 = vand.u32 2147483647, %v844
    %vm855 = vcmp.eq.f32.partialorder %v854, 8.507059e+37
    %v856 = vand.u32 %v844, 2147483648
    %v857 = vor.u32 1.1754944e-38, %v856
    %v858 = vsel %vm855, %v857, %v853
    %v859 = vmul.f32 1.0, %v858
    %860 = vmatpush.bf16.msra.mxu0 0
    %861 = vmatpush.bf16.msra.mxu0 0
    %862 = vmatpush.bf16.msra.mxu0 0
    %863 = vmatpush.bf16.msra.mxu0 0
    %864 = vmatpush.bf16.msra.mxu0 %v535
    %865 = vmatpush.bf16.msra.mxu0 %v534
    %866 = vmatpush.bf16.msra.mxu0 %v533
    %867 = vmatpush.bf16.msra.mxu0 %v532
    %868 = vmatmul.bf16.gmra.mxu0 %v825
    %v869 = vpop.f32.mrf.mxu0
    %v870 = vadd.f32 %v453, %v869
    %v871 = vpop.f32.mrf.mxu0
    %872 = vdwg.mxu0
    %v873 = vmul.f32 %v859, %v870
    %v874 = vadd.f32 %v430, %v873
    %v875 = vtanh.pop %v874
    %v876 = vsub.f32 %v822, %v875
    %878 = vrot.lane.b32.xlu0 %v876, 64
    %v879 = vpop.permute.xlu0 %878
    %v881 = vmul.f32 %v859, %v879
    %883 = vrot.lane.b32.xlu0 %v881, 64
    %v884 = vpop.permute.xlu0 %883
    %v886 = vadd.f32 %v875, %v884
    %v887 = vpack.c.bf16 %v886, %v886
    %v889 = vsel %vm479, %v887, 0
    %891 = vmatpush.bf16.msra.mxu0 0
    %892 = vmatpush.bf16.msra.mxu0 0
    %893 = vmatpush.bf16.msra.mxu0 0
    %894 = vmatpush.bf16.msra.mxu0 0
    %895 = vmatpush.bf16.msra.mxu0 %v474
    %896 = vmatpush.bf16.msra.mxu0 %v473
    %897 = vmatpush.bf16.msra.mxu0 %v472
    %898 = vmatpush.bf16.msra.mxu0 %v471
    %899 = vmatmul.bf16.gmra.mxu0 %v889
    %v900 = vpop.f32.mrf.mxu0
    %v901 = vadd.f32 0.0, %v900
    %v902 = vpop.f32.mrf.mxu0
    %903 = vdwg.mxu0
    %v904 = vadd.f32 %v431, %v901
    %v905 = vxor.u32 %v904, 2147483648
    %v906 = vmul.f32 %v905, 1.442695
    %v907 = vpow.pop %v906
    %v908 = vadd.f32 %v907, 1.0
    %v909 = vrcp.pop %v908
    %v910 = vmul.f32 %v908, %v909
    %v911 = vsub.f32 1.0, %v910
    %v912 = vmul.f32 %v909, %v911
    %v913 = vadd.f32 %v909, %v912
    %vm914 = vweird.f32 %v908
    %vm915 = vweird.f32 %v909
    %vm916 = vmor %vm914, %vm915
    %v917 = vsel %vm916, %v909, %v913
    %v918 = vand.u32 2147483647, %v908
    %vm919 = vcmp.eq.f32.partialorder %v918, 8.507059e+37
    %v920 = vand.u32 %v908, 2147483648
    %v921 = vor.u32 1.1754944e-38, %v920
    %v922 = vsel %vm919, %v921, %v917
    %v923 = vmul.f32 1.0, %v922
    %924 = vmatpush.bf16.msra.mxu0 0
    %925 = vmatpush.bf16.msra.mxu0 0
    %926 = vmatpush.bf16.msra.mxu0 0
    %927 = vmatpush.bf16.msra.mxu0 0
    %928 = vmatpush.bf16.msra.mxu0 %v535
    %929 = vmatpush.bf16.msra.mxu0 %v534
    %930 = vmatpush.bf16.msra.mxu0 %v533
    %931 = vmatpush.bf16.msra.mxu0 %v532
    %932 = vmatmul.bf16.gmra.mxu0 %v889
    %v933 = vpop.f32.mrf.mxu0
    %v934 = vadd.f32 %v453, %v933
    %v935 = vpop.f32.mrf.mxu0
    %936 = vdwg.mxu0
    %v937 = vmul.f32 %v923, %v934
    %v938 = vadd.f32 %v432, %v937
    %v939 = vtanh.pop %v938
    %v940 = vsub.f32 %v886, %v939
    %942 = vrot.lane.b32.xlu0 %v940, 64
    %v943 = vpop.permute.xlu0 %942
    %v945 = vmul.f32 %v923, %v943
    %947 = vrot.lane.b32.xlu0 %v945, 64
    %v948 = vpop.permute.xlu0 %947
    %v950 = vadd.f32 %v939, %v948
    %v951 = vpack.c.bf16 %v950, %v950
    %v953 = vsel %vm479, %v951, 0
    %955 = vmatpush.bf16.msra.mxu0 0
    %956 = vmatpush.bf16.msra.mxu0 0
    %957 = vmatpush.bf16.msra.mxu0 0
    %958 = vmatpush.bf16.msra.mxu0 0
    %959 = vmatpush.bf16.msra.mxu0 %v474
    %960 = vmatpush.bf16.msra.mxu0 %v473
    %961 = vmatpush.bf16.msra.mxu0 %v472
    %962 = vmatpush.bf16.msra.mxu0 %v471
    %963 = vmatmul.bf16.gmra.mxu0 %v953
    %v964 = vpop.f32.mrf.mxu0
    %v965 = vadd.f32 0.0, %v964
    %v966 = vpop.f32.mrf.mxu0
    %967 = vdwg.mxu0
    %v968 = vadd.f32 %v433, %v965
    %v969 = vxor.u32 %v968, 2147483648
    %v970 = vmul.f32 %v969, 1.442695
    %v971 = vpow.pop %v970
    %v972 = vadd.f32 %v971, 1.0
    %v973 = vrcp.pop %v972
    %v974 = vmul.f32 %v972, %v973
    %v975 = vsub.f32 1.0, %v974
    %v976 = vmul.f32 %v973, %v975
    %v977 = vadd.f32 %v973, %v976
    %vm978 = vweird.f32 %v972
    %vm979 = vweird.f32 %v973
    %vm980 = vmor %vm978, %vm979
    %v981 = vsel %vm980, %v973, %v977
    %v982 = vand.u32 2147483647, %v972
    %vm983 = vcmp.eq.f32.partialorder %v982, 8.507059e+37
    %v984 = vand.u32 %v972, 2147483648
    %v985 = vor.u32 1.1754944e-38, %v984
    %v986 = vsel %vm983, %v985, %v981
    %v987 = vmul.f32 1.0, %v986
    %988 = vmatpush.bf16.msra.mxu0 0
    %989 = vmatpush.bf16.msra.mxu0 0
    %990 = vmatpush.bf16.msra.mxu0 0
    %991 = vmatpush.bf16.msra.mxu0 0
    %992 = vmatpush.bf16.msra.mxu0 %v535
    %993 = vmatpush.bf16.msra.mxu0 %v534
    %994 = vmatpush.bf16.msra.mxu0 %v533
    %995 = vmatpush.bf16.msra.mxu0 %v532
    %996 = vmatmul.bf16.gmra.mxu0 %v953
    %v997 = vpop.f32.mrf.mxu0
    %v998 = vadd.f32 %v453, %v997
    %v999 = vpop.f32.mrf.mxu0
    %1000 = vdwg.mxu0
    %v1001 = vmul.f32 %v987, %v998
    %v1002 = vadd.f32 %v434, %v1001
    %v1003 = vtanh.pop %v1002
    %v1004 = vsub.f32 %v950, %v1003
    %1006 = vrot.lane.b32.xlu0 %v1004, 64
    %v1007 = vpop.permute.xlu0 %1006
    %v1009 = vmul.f32 %v987, %v1007
    %1011 = vrot.lane.b32.xlu0 %v1009, 64
    %v1012 = vpop.permute.xlu0 %1011
    %v1014 = vadd.f32 %v1003, %v1012
    %v1015 = vsel %vm281, 1, 0
    %vm1016 = vcmp.eq.s32.totalorder %v1015, 1
    %v1017 = vsel %vm1016, %v566, %v1014
    %v1018 = vsel %vm1016, %v630, %v950
    %v1019 = vsel %vm1016, %v694, %v886
    %v1020 = vsel %vm1016, %v758, %v822
    %v1021 = vsel %vm1016, %v822, %v758
    %v1022 = vsel %vm1016, %v886, %v694
    %v1023 = vsel %vm1016, %v950, %v630
    %v1024 = vsel %vm1016, %v1014, %v566
    %v1025 = vpack.c.bf16 %v1018, %v1017
    %v1026 = vpack.c.bf16 %v1020, %v1019
    %v1027 = vpack.c.bf16 %v1022, %v1021
    %v1028 = vpack.c.bf16 %v1024, %v1023
    %v1029 = vld [vmem:[%s8] sm:$0xff]
    %v1030 = vld [vmem:[%s8 + $0x8] sm:$0xff]
    %v1031 = vld [vmem:[%s8 + $0x10] sm:$0xff]
    %v1032 = vld [vmem:[%s8 + $0x18] sm:$0xff]
    %v1033 = vld [vmem:[%s8 + $0x20] sm:$0xff]
    %v1034 = vld [vmem:[%s8 + $0x28] sm:$0xff]
    %v1035 = vld [vmem:[%s8 + $0x30] sm:$0xff]
    %v1036 = vld [vmem:[%s8 + $0x38] sm:$0xff]
    %v1037 = vld [vmem:[%s9] sm:$0x3]
    %v1039 = vperm.slane %v1037, 0
    %v1040 = vperm.slane %v1037, 1
    %v1051 = vunpack.c.l.b16 %v1029
    %v1052 = vunpack.c.h.b16 %v1029
    %v1053 = vunpack.c.l.b16 %v1030
    %v1054 = vunpack.c.h.b16 %v1030
    %v1055 = vunpack.c.l.b16 %v1031
    %v1056 = vunpack.c.h.b16 %v1031
    %v1057 = vunpack.c.l.b16 %v1032
    %v1058 = vunpack.c.h.b16 %v1032
    %v1059 = vunpack.c.l.b16 %v1033
    %v1060 = vunpack.c.h.b16 %v1033
    %v1061 = vunpack.c.l.b16 %v1034
    %v1062 = vunpack.c.h.b16 %v1034
    %v1063 = vunpack.c.l.b16 %v1035
    %v1064 = vunpack.c.h.b16 %v1035
    %v1065 = vunpack.c.l.b16 %v1036
    %v1066 = vunpack.c.h.b16 %v1036
    %v1067 = vpack.c.b16 %v1053, %v1051
    %v1068 = vpack.c.b16 %v1054, %v1052
    %v1069 = vpack.c.b16 %v1057, %v1055
    %v1070 = vpack.c.b16 %v1058, %v1056
    %v1071 = vpack.c.b16 %v1061, %v1059
    %v1072 = vpack.c.b16 %v1062, %v1060
    %v1073 = vpack.c.b16 %v1065, %v1063
    %v1074 = vpack.c.b16 %v1066, %v1064
    %v1084 = vsel %vm479, %v1025, 0
    %v1087 = vsel %vm479, %v1026, 0
    %v1090 = vsel %vm479, %v1027, 0
    %v1093 = vsel %vm479, %v1028, 0
    %1095 = vmatpush.bf16.msra.mxu0 0
    %1096 = vmatpush.bf16.msra.mxu0 0
    %1097 = vmatpush.bf16.msra.mxu0 0
    %1098 = vmatpush.bf16.msra.mxu0 0
    %1099 = vmatpush.bf16.msra.mxu0 %v1073
    %1100 = vmatpush.bf16.msra.mxu0 %v1071
    %1101 = vmatpush.bf16.msra.mxu0 %v1069
    %1102 = vmatpush.bf16.msra.mxu0 %v1067
    %1103 = vmatmul.bf16.gmra.mxu0 %v1084
    %v1104 = vpop.f32.mrf.mxu0
    %v1105 = vadd.f32 %v1039, %v1104
    %v1106 = vpop.f32.mrf.mxu0
    %v1107 = vadd.f32 %v1039, %v1106
    %1108 = vmatmul.bf16.gmra.mxu0 %v1087
    %v1109 = vpop.f32.mrf.mxu0
    %v1110 = vadd.f32 %v1039, %v1109
    %v1111 = vpop.f32.mrf.mxu0
    %v1112 = vadd.f32 %v1039, %v1111
    %1113 = vmatmul.bf16.gmra.mxu0 %v1090
    %v1114 = vpop.f32.mrf.mxu0
    %v1115 = vadd.f32 %v1039, %v1114
    %v1116 = vpop.f32.mrf.mxu0
    %v1117 = vadd.f32 %v1039, %v1116
    %1118 = vmatmul.bf16.gmra.mxu0 %v1093
    %v1119 = vpop.f32.mrf.mxu0
    %v1120 = vadd.f32 %v1039, %v1119
    %v1121 = vpop.f32.mrf.mxu0
    %v1122 = vadd.f32 %v1039, %v1121
    %1123 = vdwg.mxu0
    %1124 = vmatpush.bf16.msra.mxu0 0
    %1125 = vmatpush.bf16.msra.mxu0 0
    %1126 = vmatpush.bf16.msra.mxu0 0
    %1127 = vmatpush.bf16.msra.mxu0 0
    %1128 = vmatpush.bf16.msra.mxu0 %v1074
    %1129 = vmatpush.bf16.msra.mxu0 %v1072
    %1130 = vmatpush.bf16.msra.mxu0 %v1070
    %1131 = vmatpush.bf16.msra.mxu0 %v1068
    %1132 = vmatmul.bf16.gmra.mxu0 %v1084
    %v1133 = vpop.f32.mrf.mxu0
    %v1134 = vadd.f32 %v1040, %v1133
    %v1135 = vpop.f32.mrf.mxu0
    %v1136 = vadd.f32 %v1040, %v1135
    %1137 = vmatmul.bf16.gmra.mxu0 %v1087
    %v1138 = vpop.f32.mrf.mxu0
    %v1139 = vadd.f32 %v1040, %v1138
    %v1140 = vpop.f32.mrf.mxu0
    %v1141 = vadd.f32 %v1040, %v1140
    %1142 = vmatmul.bf16.gmra.mxu0 %v1090
    %v1143 = vpop.f32.mrf.mxu0
    %v1144 = vadd.f32 %v1040, %v1143
    %v1145 = vpop.f32.mrf.mxu0
    %v1146 = vadd.f32 %v1040, %v1145
    %1147 = vmatmul.bf16.gmra.mxu0 %v1093
    %v1148 = vpop.f32.mrf.mxu0
    %v1149 = vadd.f32 %v1040, %v1148
    %v1150 = vpop.f32.mrf.mxu0
    %v1151 = vadd.f32 %v1040, %v1150
    %1152 = vdwg.mxu0
    %v1153 = vsel %vm417, %v1105, %v1122
    %v1154 = vsel %vm418, %v1134, %v1151
    %v1155 = vsel %vm417, %v1107, %v1120
    %v1156 = vsel %vm418, %v1136, %v1149
    %v1157 = vsel %vm417, %v1110, %v1117
    %v1158 = vsel %vm418, %v1139, %v1146
    %v1159 = vsel %vm417, %v1112, %v1115
    %v1160 = vsel %vm418, %v1141, %v1144
    %v1161 = vsel %vm417, %v1115, %v1112
    %v1162 = vsel %vm418, %v1144, %v1141
    %v1163 = vsel %vm417, %v1117, %v1110
    %v1164 = vsel %vm418, %v1146, %v1139
    %v1165 = vsel %vm417, %v1120, %v1107
    %v1166 = vsel %vm418, %v1149, %v1136
    %v1167 = vsel %vm417, %v1122, %v1105
    %v1168 = vsel %vm418, %v1151, %v1134
    %v1169 = vld [vmem:[#allocation9] sm:$0xf]
    %v1170 = vld [vmem:[#allocation9 + $0x4] sm:$0xf]
    %v1171 = vld [vmem:[#allocation9 + $0x8] sm:$0xf]
    %v1172 = vld [vmem:[#allocation9 + $0xc] sm:$0xf]
    %v1173 = vld [vmem:[#allocation9 + $0x10] sm:$0xf]
    %v1174 = vld [vmem:[#allocation9 + $0x14] sm:$0xf]
    %v1175 = vld [vmem:[#allocation9 + $0x18] sm:$0xf]
    %v1176 = vld [vmem:[#allocation9 + $0x1c] sm:$0xf]
    %v1177 = vld [vmem:[#allocation11] sm:$0xf]
    %v1178 = vld [vmem:[#allocation11 + $0x4] sm:$0xf]
    %v1179 = vld [vmem:[#allocation11 + $0x8] sm:$0xf]
    %v1180 = vld [vmem:[#allocation11 + $0xc] sm:$0xf]
    %v1181 = vld [vmem:[#allocation11 + $0x10] sm:$0xf]
    %v1182 = vld [vmem:[#allocation11 + $0x14] sm:$0xf]
    %v1183 = vld [vmem:[#allocation11 + $0x18] sm:$0xf]
    %v1184 = vld [vmem:[#allocation11 + $0x1c] sm:$0xf]
    %v1185 = vld [vmem:[#allocation12] sm:$0x1]
    %v1187 = vperm.slane %v1185, 0
    %v1197 = vunpack.c.l.b16 %v1169
    %v1198 = vunpack.c.l.b16 %v1170
    %v1199 = vunpack.c.l.b16 %v1171
    %v1200 = vunpack.c.l.b16 %v1172
    %v1201 = vunpack.c.l.b16 %v1173
    %v1202 = vunpack.c.l.b16 %v1174
    %v1203 = vunpack.c.l.b16 %v1175
    %v1204 = vunpack.c.l.b16 %v1176
    %v1205 = vpack.c.b16 %v1198, %v1197
    %v1206 = vpack.c.b16 %v1200, %v1199
    %v1207 = vpack.c.b16 %v1202, %v1201
    %v1208 = vpack.c.b16 %v1204, %v1203
    %1213 = vmatpush.bf16.msra.mxu0 0
    %1214 = vmatpush.bf16.msra.mxu0 0
    %1215 = vmatpush.bf16.msra.mxu0 0
    %1216 = vmatpush.bf16.msra.mxu0 0
    %1217 = vmatpush.bf16.msra.mxu0 %v1208
    %1218 = vmatpush.bf16.msra.mxu0 %v1207
    %1219 = vmatpush.bf16.msra.mxu0 %v1206
    %1220 = vmatpush.bf16.msra.mxu0 %v1205
    %1221 = vmatmul.bf16.gmra.mxu0 %v481
    %v1222 = vpop.f32.mrf.mxu0
    %v1223 = vadd.f32 0.0, %v1222
    %v1224 = vpop.f32.mrf.mxu0
    %1225 = vdwg.mxu0
    %v1226 = vadd.f32 %v1153, %v1223
    %v1227 = vxor.u32 %v1226, 2147483648
    %v1228 = vmul.f32 %v1227, 1.442695
    %v1229 = vpow.pop %v1228
    %v1230 = vadd.f32 %v1229, 1.0
    %v1231 = vrcp.pop %v1230
    %v1232 = vmul.f32 %v1230, %v1231
    %v1233 = vsub.f32 1.0, %v1232
    %v1234 = vmul.f32 %v1231, %v1233
    %v1235 = vadd.f32 %v1231, %v1234
    %vm1236 = vweird.f32 %v1230
    %vm1237 = vweird.f32 %v1231
    %vm1238 = vmor %vm1236, %vm1237
    %v1239 = vsel %vm1238, %v1231, %v1235
    %v1240 = vand.u32 2147483647, %v1230
    %vm1241 = vcmp.eq.f32.partialorder %v1240, 8.507059e+37
    %v1242 = vand.u32 %v1230, 2147483648
    %v1243 = vor.u32 1.1754944e-38, %v1242
    %v1244 = vsel %vm1241, %v1243, %v1239
    %v1245 = vmul.f32 1.0, %v1244
    %v1254 = vunpack.c.l.b16 %v1177
    %v1255 = vunpack.c.l.b16 %v1178
    %v1256 = vunpack.c.l.b16 %v1179
    %v1257 = vunpack.c.l.b16 %v1180
    %v1258 = vunpack.c.l.b16 %v1181
    %v1259 = vunpack.c.l.b16 %v1182
    %v1260 = vunpack.c.l.b16 %v1183
    %v1261 = vunpack.c.l.b16 %v1184
    %v1262 = vpack.c.b16 %v1255, %v1254
    %v1263 = vpack.c.b16 %v1257, %v1256
    %v1264 = vpack.c.b16 %v1259, %v1258
    %v1265 = vpack.c.b16 %v1261, %v1260
    %1270 = vmatpush.bf16.msra.mxu0 0
    %1271 = vmatpush.bf16.msra.mxu0 0
    %1272 = vmatpush.bf16.msra.mxu0 0
    %1273 = vmatpush.bf16.msra.mxu0 0
    %1274 = vmatpush.bf16.msra.mxu0 %v1265
    %1275 = vmatpush.bf16.msra.mxu0 %v1264
    %1276 = vmatpush.bf16.msra.mxu0 %v1263
    %1277 = vmatpush.bf16.msra.mxu0 %v1262
    %1278 = vmatmul.bf16.gmra.mxu0 %v481
    %v1279 = vpop.f32.mrf.mxu0
    %v1280 = vadd.f32 %v1187, %v1279
    %v1281 = vpop.f32.mrf.mxu0
    %1282 = vdwg.mxu0
    %v1283 = vmul.f32 %v1245, %v1280
    %v1284 = vadd.f32 %v1154, %v1283
    %v1285 = vtanh.pop %v1284
    %v1286 = vsub.f32 0.0, %v1285
    %1288 = vrot.lane.b32.xlu0 %v1286, 64
    %v1289 = vpop.permute.xlu0 %1288
    %v1291 = vmul.f32 %v1245, %v1289
    %1293 = vrot.lane.b32.xlu0 %v1291, 64
    %v1294 = vpop.permute.xlu0 %1293
    %v1296 = vadd.f32 %v1285, %v1294
    %v1297 = vpack.c.bf16 %v1296, %v1296
    %v1299 = vsel %vm479, %v1297, 0
    %1301 = vmatpush.bf16.msra.mxu0 0
    %1302 = vmatpush.bf16.msra.mxu0 0
    %1303 = vmatpush.bf16.msra.mxu0 0
    %1304 = vmatpush.bf16.msra.mxu0 0
    %1305 = vmatpush.bf16.msra.mxu0 %v1208
    %1306 = vmatpush.bf16.msra.mxu0 %v1207
    %1307 = vmatpush.bf16.msra.mxu0 %v1206
    %1308 = vmatpush.bf16.msra.mxu0 %v1205
    %1309 = vmatmul.bf16.gmra.mxu0 %v1299
    %v1310 = vpop.f32.mrf.mxu0
    %v1311 = vadd.f32 0.0, %v1310
    %v1312 = vpop.f32.mrf.mxu0
    %1313 = vdwg.mxu0
    %v1314 = vadd.f32 %v1155, %v1311
    %v1315 = vxor.u32 %v1314, 2147483648
    %v1316 = vmul.f32 %v1315, 1.442695
    %v1317 = vpow.pop %v1316
    %v1318 = vadd.f32 %v1317, 1.0
    %v1319 = vrcp.pop %v1318
    %v1320 = vmul.f32 %v1318, %v1319
    %v1321 = vsub.f32 1.0, %v1320
    %v1322 = vmul.f32 %v1319, %v1321
    %v1323 = vadd.f32 %v1319, %v1322
    %vm1324 = vweird.f32 %v1318
    %vm1325 = vweird.f32 %v1319
    %vm1326 = vmor %vm1324, %vm1325
    %v1327 = vsel %vm1326, %v1319, %v1323
    %v1328 = vand.u32 2147483647, %v1318
    %vm1329 = vcmp.eq.f32.partialorder %v1328, 8.507059e+37
    %v1330 = vand.u32 %v1318, 2147483648
    %v1331 = vor.u32 1.1754944e-38, %v1330
    %v1332 = vsel %vm1329, %v1331, %v1327
    %v1333 = vmul.f32 1.0, %v1332
    %1334 = vmatpush.bf16.msra.mxu0 0
    %1335 = vmatpush.bf16.msra.mxu0 0
    %1336 = vmatpush.bf16.msra.mxu0 0
    %1337 = vmatpush.bf16.msra.mxu0 0
    %1338 = vmatpush.bf16.msra.mxu0 %v1265
    %1339 = vmatpush.bf16.msra.mxu0 %v1264
    %1340 = vmatpush.bf16.msra.mxu0 %v1263
    %1341 = vmatpush.bf16.msra.mxu0 %v1262
    %1342 = vmatmul.bf16.gmra.mxu0 %v1299
    %v1343 = vpop.f32.mrf.mxu0
    %v1344 = vadd.f32 %v1187, %v1343
    %v1345 = vpop.f32.mrf.mxu0
    %1346 = vdwg.mxu0
    %v1347 = vmul.f32 %v1333, %v1344
    %v1348 = vadd.f32 %v1156, %v1347
    %v1349 = vtanh.pop %v1348
    %v1350 = vsub.f32 %v1296, %v1349
    %1352 = vrot.lane.b32.xlu0 %v1350, 64
    %v1353 = vpop.permute.xlu0 %1352
    %v1355 = vmul.f32 %v1333, %v1353
    %1357 = vrot.lane.b32.xlu0 %v1355, 64
    %v1358 = vpop.permute.xlu0 %1357
    %v1360 = vadd.f32 %v1349, %v1358
    %v1361 = vpack.c.bf16 %v1360, %v1360
    %v1363 = vsel %vm479, %v1361, 0
    %1365 = vmatpush.bf16.msra.mxu0 0
    %1366 = vmatpush.bf16.msra.mxu0 0
    %1367 = vmatpush.bf16.msra.mxu0 0
    %1368 = vmatpush.bf16.msra.mxu0 0
    %1369 = vmatpush.bf16.msra.mxu0 %v1208
    %1370 = vmatpush.bf16.msra.mxu0 %v1207
    %1371 = vmatpush.bf16.msra.mxu0 %v1206
    %1372 = vmatpush.bf16.msra.mxu0 %v1205
    %1373 = vmatmul.bf16.gmra.mxu0 %v1363
    %v1374 = vpop.f32.mrf.mxu0
    %v1375 = vadd.f32 0.0, %v1374
    %v1376 = vpop.f32.mrf.mxu0
    %1377 = vdwg.mxu0
    %v1378 = vadd.f32 %v1157, %v1375
    %v1379 = vxor.u32 %v1378, 2147483648
    %v1380 = vmul.f32 %v1379, 1.442695
    %v1381 = vpow.pop %v1380
    %v1382 = vadd.f32 %v1381, 1.0
    %v1383 = vrcp.pop %v1382
    %v1384 = vmul.f32 %v1382, %v1383
    %v1385 = vsub.f32 1.0, %v1384
    %v1386 = vmul.f32 %v1383, %v1385
    %v1387 = vadd.f32 %v1383, %v1386
    %vm1388 = vweird.f32 %v1382
    %vm1389 = vweird.f32 %v1383
    %vm1390 = vmor %vm1388, %vm1389
    %v1391 = vsel %vm1390, %v1383, %v1387
    %v1392 = vand.u32 2147483647, %v1382
    %vm1393 = vcmp.eq.f32.partialorder %v1392, 8.507059e+37
    %v1394 = vand.u32 %v1382, 2147483648
    %v1395 = vor.u32 1.1754944e-38, %v1394
    %v1396 = vsel %vm1393, %v1395, %v1391
    %v1397 = vmul.f32 1.0, %v1396
    %1398 = vmatpush.bf16.msra.mxu0 0
    %1399 = vmatpush.bf16.msra.mxu0 0
    %1400 = vmatpush.bf16.msra.mxu0 0
    %1401 = vmatpush.bf16.msra.mxu0 0
    %1402 = vmatpush.bf16.msra.mxu0 %v1265
    %1403 = vmatpush.bf16.msra.mxu0 %v1264
    %1404 = vmatpush.bf16.msra.mxu0 %v1263
    %1405 = vmatpush.bf16.msra.mxu0 %v1262
    %1406 = vmatmul.bf16.gmra.mxu0 %v1363
    %v1407 = vpop.f32.mrf.mxu0
    %v1408 = vadd.f32 %v1187, %v1407
    %v1409 = vpop.f32.mrf.mxu0
    %1410 = vdwg.mxu0
    %v1411 = vmul.f32 %v1397, %v1408
    %v1412 = vadd.f32 %v1158, %v1411
    %v1413 = vtanh.pop %v1412
    %v1414 = vsub.f32 %v1360, %v1413
    %1416 = vrot.lane.b32.xlu0 %v1414, 64
    %v1417 = vpop.permute.xlu0 %1416
    %v1419 = vmul.f32 %v1397, %v1417
    %1421 = vrot.lane.b32.xlu0 %v1419, 64
    %v1422 = vpop.permute.xlu0 %1421
    %v1424 = vadd.f32 %v1413, %v1422
    %v1425 = vpack.c.bf16 %v1424, %v1424
    %v1427 = vsel %vm479, %v1425, 0
    %1429 = vmatpush.bf16.msra.mxu0 0
    %1430 = vmatpush.bf16.msra.mxu0 0
    %1431 = vmatpush.bf16.msra.mxu0 0
    %1432 = vmatpush.bf16.msra.mxu0 0
    %1433 = vmatpush.bf16.msra.mxu0 %v1208
    %1434 = vmatpush.bf16.msra.mxu0 %v1207
    %1435 = vmatpush.bf16.msra.mxu0 %v1206
    %1436 = vmatpush.bf16.msra.mxu0 %v1205
    %1437 = vmatmul.bf16.gmra.mxu0 %v1427
    %v1438 = vpop.f32.mrf.mxu0
    %v1439 = vadd.f32 0.0, %v1438
    %v1440 = vpop.f32.mrf.mxu0
    %1441 = vdwg.mxu0
    %v1442 = vadd.f32 %v1159, %v1439
    %v1443 = vxor.u32 %v1442, 2147483648
    %v1444 = vmul.f32 %v1443, 1.442695
    %v1445 = vpow.pop %v1444
    %v1446 = vadd.f32 %v1445, 1.0
    %v1447 = vrcp.pop %v1446
    %v1448 = vmul.f32 %v1446, %v1447
    %v1449 = vsub.f32 1.0, %v1448
    %v1450 = vmul.f32 %v1447, %v1449
    %v1451 = vadd.f32 %v1447, %v1450
    %vm1452 = vweird.f32 %v1446
    %vm1453 = vweird.f32 %v1447
    %vm1454 = vmor %vm1452, %vm1453
    %v1455 = vsel %vm1454, %v1447, %v1451
    %v1456 = vand.u32 2147483647, %v1446
    %vm1457 = vcmp.eq.f32.partialorder %v1456, 8.507059e+37
    %v1458 = vand.u32 %v1446, 2147483648
    %v1459 = vor.u32 1.1754944e-38, %v1458
    %v1460 = vsel %vm1457, %v1459, %v1455
    %v1461 = vmul.f32 1.0, %v1460
    %1462 = vmatpush.bf16.msra.mxu0 0
    %1463 = vmatpush.bf16.msra.mxu0 0
    %1464 = vmatpush.bf16.msra.mxu0 0
    %1465 = vmatpush.bf16.msra.mxu0 0
    %1466 = vmatpush.bf16.msra.mxu0 %v1265
    %1467 = vmatpush.bf16.msra.mxu0 %v1264
    %1468 = vmatpush.bf16.msra.mxu0 %v1263
    %1469 = vmatpush.bf16.msra.mxu0 %v1262
    %1470 = vmatmul.bf16.gmra.mxu0 %v1427
    %v1471 = vpop.f32.mrf.mxu0
    %v1472 = vadd.f32 %v1187, %v1471
    %v1473 = vpop.f32.mrf.mxu0
    %1474 = vdwg.mxu0
    %v1475 = vmul.f32 %v1461, %v1472
    %v1476 = vadd.f32 %v1160, %v1475
    %v1477 = vtanh.pop %v1476
    %v1478 = vsub.f32 %v1424, %v1477
    %1480 = vrot.lane.b32.xlu0 %v1478, 64
    %v1481 = vpop.permute.xlu0 %1480
    %v1483 = vmul.f32 %v1461, %v1481
    %1485 = vrot.lane.b32.xlu0 %v1483, 64
    %v1486 = vpop.permute.xlu0 %1485
    %v1488 = vadd.f32 %v1477, %v1486
    %v1489 = vpack.c.bf16 %v1488, %v1488
    %v1491 = vsel %vm479, %v1489, 0
    %1493 = vmatpush.bf16.msra.mxu0 0
    %1494 = vmatpush.bf16.msra.mxu0 0
    %1495 = vmatpush.bf16.msra.mxu0 0
    %1496 = vmatpush.bf16.msra.mxu0 0
    %1497 = vmatpush.bf16.msra.mxu0 %v1208
    %1498 = vmatpush.bf16.msra.mxu0 %v1207
    %1499 = vmatpush.bf16.msra.mxu0 %v1206
    %1500 = vmatpush.bf16.msra.mxu0 %v1205
    %1501 = vmatmul.bf16.gmra.mxu0 %v1491
    %v1502 = vpop.f32.mrf.mxu0
    %v1503 = vadd.f32 0.0, %v1502
    %v1504 = vpop.f32.mrf.mxu0
    %1505 = vdwg.mxu0
    %v1506 = vadd.f32 %v1161, %v1503
    %v1507 = vxor.u32 %v1506, 2147483648
    %v1508 = vmul.f32 %v1507, 1.442695
    %v1509 = vpow.pop %v1508
    %v1510 = vadd.f32 %v1509, 1.0
    %v1511 = vrcp.pop %v1510
    %v1512 = vmul.f32 %v1510, %v1511
    %v1513 = vsub.f32 1.0, %v1512
    %v1514 = vmul.f32 %v1511, %v1513
    %v1515 = vadd.f32 %v1511, %v1514
    %vm1516 = vweird.f32 %v1510
    %vm1517 = vweird.f32 %v1511
    %vm1518 = vmor %vm1516, %vm1517
    %v1519 = vsel %vm1518, %v1511, %v1515
    %v1520 = vand.u32 2147483647, %v1510
    %vm1521 = vcmp.eq.f32.partialorder %v1520, 8.507059e+37
    %v1522 = vand.u32 %v1510, 2147483648
    %v1523 = vor.u32 1.1754944e-38, %v1522
    %v1524 = vsel %vm1521, %v1523, %v1519
    %v1525 = vmul.f32 1.0, %v1524
    %1526 = vmatpush.bf16.msra.mxu0 0
    %1527 = vmatpush.bf16.msra.mxu0 0
    %1528 = vmatpush.bf16.msra.mxu0 0
    %1529 = vmatpush.bf16.msra.mxu0 0
    %1530 = vmatpush.bf16.msra.mxu0 %v1265
    %1531 = vmatpush.bf16.msra.mxu0 %v1264
    %1532 = vmatpush.bf16.msra.mxu0 %v1263
    %1533 = vmatpush.bf16.msra.mxu0 %v1262
    %1534 = vmatmul.bf16.gmra.mxu0 %v1491
    %v1535 = vpop.f32.mrf.mxu0
    %v1536 = vadd.f32 %v1187, %v1535
    %v1537 = vpop.f32.mrf.mxu0
    %1538 = vdwg.mxu0
    %v1539 = vmul.f32 %v1525, %v1536
    %v1540 = vadd.f32 %v1162, %v1539
    %v1541 = vtanh.pop %v1540
    %v1542 = vsub.f32 %v1488, %v1541
    %1544 = vrot.lane.b32.xlu0 %v1542, 64
    %v1545 = vpop.permute.xlu0 %1544
    %v1547 = vmul.f32 %v1525, %v1545
    %1549 = vrot.lane.b32.xlu0 %v1547, 64
    %v1550 = vpop.permute.xlu0 %1549
    %v1552 = vadd.f32 %v1541, %v1550
    %v1553 = vpack.c.bf16 %v1552, %v1552
    %v1555 = vsel %vm479, %v1553, 0
    %1557 = vmatpush.bf16.msra.mxu0 0
    %1558 = vmatpush.bf16.msra.mxu0 0
    %1559 = vmatpush.bf16.msra.mxu0 0
    %1560 = vmatpush.bf16.msra.mxu0 0
    %1561 = vmatpush.bf16.msra.mxu0 %v1208
    %1562 = vmatpush.bf16.msra.mxu0 %v1207
    %1563 = vmatpush.bf16.msra.mxu0 %v1206
    %1564 = vmatpush.bf16.msra.mxu0 %v1205
    %1565 = vmatmul.bf16.gmra.mxu0 %v1555
    %v1566 = vpop.f32.mrf.mxu0
    %v1567 = vadd.f32 0.0, %v1566
    %v1568 = vpop.f32.mrf.mxu0
    %1569 = vdwg.mxu0
    %v1570 = vadd.f32 %v1163, %v1567
    %v1571 = vxor.u32 %v1570, 2147483648
    %v1572 = vmul.f32 %v1571, 1.442695
    %v1573 = vpow.pop %v1572
    %v1574 = vadd.f32 %v1573, 1.0
    %v1575 = vrcp.pop %v1574
    %v1576 = vmul.f32 %v1574, %v1575
    %v1577 = vsub.f32 1.0, %v1576
    %v1578 = vmul.f32 %v1575, %v1577
    %v1579 = vadd.f32 %v1575, %v1578
    %vm1580 = vweird.f32 %v1574
    %vm1581 = vweird.f32 %v1575
    %vm1582 = vmor %vm1580, %vm1581
    %v1583 = vsel %vm1582, %v1575, %v1579
    %v1584 = vand.u32 2147483647, %v1574
    %vm1585 = vcmp.eq.f32.partialorder %v1584, 8.507059e+37
    %v1586 = vand.u32 %v1574, 2147483648
    %v1587 = vor.u32 1.1754944e-38, %v1586
    %v1588 = vsel %vm1585, %v1587, %v1583
    %v1589 = vmul.f32 1.0, %v1588
    %1590 = vmatpush.bf16.msra.mxu0 0
    %1591 = vmatpush.bf16.msra.mxu0 0
    %1592 = vmatpush.bf16.msra.mxu0 0
    %1593 = vmatpush.bf16.msra.mxu0 0
    %1594 = vmatpush.bf16.msra.mxu0 %v1265
    %1595 = vmatpush.bf16.msra.mxu0 %v1264
    %1596 = vmatpush.bf16.msra.mxu0 %v1263
    %1597 = vmatpush.bf16.msra.mxu0 %v1262
    %1598 = vmatmul.bf16.gmra.mxu0 %v1555
    %v1599 = vpop.f32.mrf.mxu0
    %v1600 = vadd.f32 %v1187, %v1599
    %v1601 = vpop.f32.mrf.mxu0
    %1602 = vdwg.mxu0
    %v1603 = vmul.f32 %v1589, %v1600
    %v1604 = vadd.f32 %v1164, %v1603
    %v1605 = vtanh.pop %v1604
    %v1606 = vsub.f32 %v1552, %v1605
    %1608 = vrot.lane.b32.xlu0 %v1606, 64
    %v1609 = vpop.permute.xlu0 %1608
    %v1611 = vmul.f32 %v1589, %v1609
    %1613 = vrot.lane.b32.xlu0 %v1611, 64
    %v1614 = vpop.permute.xlu0 %1613
    %v1616 = vadd.f32 %v1605, %v1614
    %v1617 = vpack.c.bf16 %v1616, %v1616
    %v1619 = vsel %vm479, %v1617, 0
    %1621 = vmatpush.bf16.msra.mxu0 0
    %1622 = vmatpush.bf16.msra.mxu0 0
    %1623 = vmatpush.bf16.msra.mxu0 0
    %1624 = vmatpush.bf16.msra.mxu0 0
    %1625 = vmatpush.bf16.msra.mxu0 %v1208
    %1626 = vmatpush.bf16.msra.mxu0 %v1207
    %1627 = vmatpush.bf16.msra.mxu0 %v1206
    %1628 = vmatpush.bf16.msra.mxu0 %v1205
    %1629 = vmatmul.bf16.gmra.mxu0 %v1619
    %v1630 = vpop.f32.mrf.mxu0
    %v1631 = vadd.f32 0.0, %v1630
    %v1632 = vpop.f32.mrf.mxu0
    %1633 = vdwg.mxu0
    %v1634 = vadd.f32 %v1165, %v1631
    %v1635 = vxor.u32 %v1634, 2147483648
    %v1636 = vmul.f32 %v1635, 1.442695
    %v1637 = vpow.pop %v1636
    %v1638 = vadd.f32 %v1637, 1.0
    %v1639 = vrcp.pop %v1638
    %v1640 = vmul.f32 %v1638, %v1639
    %v1641 = vsub.f32 1.0, %v1640
    %v1642 = vmul.f32 %v1639, %v1641
    %v1643 = vadd.f32 %v1639, %v1642
    %vm1644 = vweird.f32 %v1638
    %vm1645 = vweird.f32 %v1639
    %vm1646 = vmor %vm1644, %vm1645
    %v1647 = vsel %vm1646, %v1639, %v1643
    %v1648 = vand.u32 2147483647, %v1638
    %vm1649 = vcmp.eq.f32.partialorder %v1648, 8.507059e+37
    %v1650 = vand.u32 %v1638, 2147483648
    %v1651 = vor.u32 1.1754944e-38, %v1650
    %v1652 = vsel %vm1649, %v1651, %v1647
    %v1653 = vmul.f32 1.0, %v1652
    %1654 = vmatpush.bf16.msra.mxu0 0
    %1655 = vmatpush.bf16.msra.mxu0 0
    %1656 = vmatpush.bf16.msra.mxu0 0
    %1657 = vmatpush.bf16.msra.mxu0 0
    %1658 = vmatpush.bf16.msra.mxu0 %v1265
    %1659 = vmatpush.bf16.msra.mxu0 %v1264
    %1660 = vmatpush.bf16.msra.mxu0 %v1263
    %1661 = vmatpush.bf16.msra.mxu0 %v1262
    %1662 = vmatmul.bf16.gmra.mxu0 %v1619
    %v1663 = vpop.f32.mrf.mxu0
    %v1664 = vadd.f32 %v1187, %v1663
    %v1665 = vpop.f32.mrf.mxu0
    %1666 = vdwg.mxu0
    %v1667 = vmul.f32 %v1653, %v1664
    %v1668 = vadd.f32 %v1166, %v1667
    %v1669 = vtanh.pop %v1668
    %v1670 = vsub.f32 %v1616, %v1669
    %1672 = vrot.lane.b32.xlu0 %v1670, 64
    %v1673 = vpop.permute.xlu0 %1672
    %v1675 = vmul.f32 %v1653, %v1673
    %1677 = vrot.lane.b32.xlu0 %v1675, 64
    %v1678 = vpop.permute.xlu0 %1677
    %v1680 = vadd.f32 %v1669, %v1678
    %v1681 = vpack.c.bf16 %v1680, %v1680
    %v1683 = vsel %vm479, %v1681, 0
    %1685 = vmatpush.bf16.msra.mxu0 0
    %1686 = vmatpush.bf16.msra.mxu0 0
    %1687 = vmatpush.bf16.msra.mxu0 0
    %1688 = vmatpush.bf16.msra.mxu0 0
    %1689 = vmatpush.bf16.msra.mxu0 %v1208
    %1690 = vmatpush.bf16.msra.mxu0 %v1207
    %1691 = vmatpush.bf16.msra.mxu0 %v1206
    %1692 = vmatpush.bf16.msra.mxu0 %v1205
    %1693 = vmatmul.bf16.gmra.mxu0 %v1683
    %v1694 = vpop.f32.mrf.mxu0
    %v1695 = vadd.f32 0.0, %v1694
    %v1696 = vpop.f32.mrf.mxu0
    %1697 = vdwg.mxu0
    %v1698 = vadd.f32 %v1167, %v1695
    %v1699 = vxor.u32 %v1698, 2147483648
    %v1700 = vmul.f32 %v1699, 1.442695
    %v1701 = vpow.pop %v1700
    %v1702 = vadd.f32 %v1701, 1.0
    %v1703 = vrcp.pop %v1702
    %v1704 = vmul.f32 %v1702, %v1703
    %v1705 = vsub.f32 1.0, %v1704
    %v1706 = vmul.f32 %v1703, %v1705
    %v1707 = vadd.f32 %v1703, %v1706
    %vm1708 = vweird.f32 %v1702
    %vm1709 = vweird.f32 %v1703
    %vm1710 = vmor %vm1708, %vm1709
    %v1711 = vsel %vm1710, %v1703, %v1707
    %v1712 = vand.u32 2147483647, %v1702
    %vm1713 = vcmp.eq.f32.partialorder %v1712, 8.507059e+37
    %v1714 = vand.u32 %v1702, 2147483648
    %v1715 = vor.u32 1.1754944e-38, %v1714
    %v1716 = vsel %vm1713, %v1715, %v1711
    %v1717 = vmul.f32 1.0, %v1716
    %1718 = vmatpush.bf16.msra.mxu0 0
    %1719 = vmatpush.bf16.msra.mxu0 0
    %1720 = vmatpush.bf16.msra.mxu0 0
    %1721 = vmatpush.bf16.msra.mxu0 0
    %1722 = vmatpush.bf16.msra.mxu0 %v1265
    %1723 = vmatpush.bf16.msra.mxu0 %v1264
    %1724 = vmatpush.bf16.msra.mxu0 %v1263
    %1725 = vmatpush.bf16.msra.mxu0 %v1262
    %1726 = vmatmul.bf16.gmra.mxu0 %v1683
    %v1727 = vpop.f32.mrf.mxu0
    %v1728 = vadd.f32 %v1187, %v1727
    %v1729 = vpop.f32.mrf.mxu0
    %1730 = vdwg.mxu0
    %v1731 = vmul.f32 %v1717, %v1728
    %v1732 = vadd.f32 %v1168, %v1731
    %v1733 = vtanh.pop %v1732
    %v1734 = vsub.f32 %v1680, %v1733
    %1736 = vrot.lane.b32.xlu0 %v1734, 64
    %v1737 = vpop.permute.xlu0 %1736
    %v1739 = vmul.f32 %v1717, %v1737
    %1741 = vrot.lane.b32.xlu0 %v1739, 64
    %v1742 = vpop.permute.xlu0 %1741
    %v1744 = vadd.f32 %v1733, %v1742
    %v1745 = vsel %vm1016, %v1296, %v1744
    %v1746 = vsel %vm1016, %v1360, %v1680
    %v1747 = vsel %vm1016, %v1424, %v1616
    %v1748 = vsel %vm1016, %v1488, %v1552
    %v1749 = vsel %vm1016, %v1552, %v1488
    %v1750 = vsel %vm1016, %v1616, %v1424
    %v1751 = vsel %vm1016, %v1680, %v1360
    %v1752 = vsel %vm1016, %v1744, %v1296
    %v1753 = vpack.c.bf16 %v1746, %v1745
    %v1754 = vpack.c.bf16 %v1748, %v1747
    %v1755 = vpack.c.bf16 %v1750, %v1749
    %v1756 = vpack.c.bf16 %v1752, %v1751
    %v1757 = vld [vmem:[#allocation14] sm:$0xf]
    %v1758 = vld [vmem:[#allocation14 + $0x4] sm:$0xf]
    %v1759 = vld [vmem:[#allocation14 + $0x8] sm:$0xf]
    %v1760 = vld [vmem:[#allocation14 + $0xc] sm:$0xf]
    %v1761 = vld [vmem:[#allocation14 + $0x10] sm:$0xf]
    %v1762 = vld [vmem:[#allocation14 + $0x14] sm:$0xf]
    %v1763 = vld [vmem:[#allocation14 + $0x18] sm:$0xf]
    %v1764 = vld [vmem:[#allocation14 + $0x1c] sm:$0xf]
    %v1765 = vld [vmem:[#allocation15] sm:$0x1]
    %v1767 = vperm.slane %v1765, 0
    %v1777 = vunpack.c.l.b16 %v1757
    %v1778 = vunpack.c.l.b16 %v1758
    %v1779 = vunpack.c.l.b16 %v1759
    %v1780 = vunpack.c.l.b16 %v1760
    %v1781 = vunpack.c.l.b16 %v1761
    %v1782 = vunpack.c.l.b16 %v1762
    %v1783 = vunpack.c.l.b16 %v1763
    %v1784 = vunpack.c.l.b16 %v1764
    %v1785 = vpack.c.b16 %v1778, %v1777
    %v1786 = vpack.c.b16 %v1780, %v1779
    %v1787 = vpack.c.b16 %v1782, %v1781
    %v1788 = vpack.c.b16 %v1784, %v1783
    %v1794 = vsel %vm479, %v1753, 0
    %v1797 = vsel %vm479, %v1754, 0
    %v1800 = vsel %vm479, %v1755, 0
    %v1803 = vsel %vm479, %v1756, 0
    %1805 = vmatpush.bf16.msra.mxu0 0
    %1806 = vmatpush.bf16.msra.mxu0 0
    %1807 = vmatpush.bf16.msra.mxu0 0
    %1808 = vmatpush.bf16.msra.mxu0 0
    %1809 = vmatpush.bf16.msra.mxu0 %v1788
    %1810 = vmatpush.bf16.msra.mxu0 %v1787
    %1811 = vmatpush.bf16.msra.mxu0 %v1786
    %1812 = vmatpush.bf16.msra.mxu0 %v1785
    %1813 = vmatmul.bf16.gmra.mxu0 %v1794
    %v1814 = vpop.f32.mrf.mxu0
    %v1815 = vadd.f32 %v1767, %v1814
    %v1816 = vpop.f32.mrf.mxu0
    %v1817 = vadd.f32 %v1767, %v1816
    %1818 = vmatmul.bf16.gmra.mxu0 %v1797
    %v1819 = vpop.f32.mrf.mxu0
    %v1820 = vadd.f32 %v1767, %v1819
    %v1821 = vpop.f32.mrf.mxu0
    %v1822 = vadd.f32 %v1767, %v1821
    %1823 = vmatmul.bf16.gmra.mxu0 %v1800
    %v1824 = vpop.f32.mrf.mxu0
    %v1825 = vadd.f32 %v1767, %v1824
    %v1826 = vpop.f32.mrf.mxu0
    %v1827 = vadd.f32 %v1767, %v1826
    %1828 = vmatmul.bf16.gmra.mxu0 %v1803
    %v1829 = vpop.f32.mrf.mxu0
    %v1830 = vadd.f32 %v1767, %v1829
    %v1831 = vpop.f32.mrf.mxu0
    %v1832 = vadd.f32 %v1767, %v1831
    %1833 = vdwg.mxu0
    %v1834 = vtanh.pop %v1815
    %v1835 = vtanh.pop %v1817
    %v1836 = vtanh.pop %v1820
    %v1837 = vtanh.pop %v1822
    %v1838 = vtanh.pop %v1825
    %v1839 = vtanh.pop %v1827
    %v1840 = vtanh.pop %v1830
    %v1841 = vtanh.pop %v1832
    %v1842 = vld [vmem:[#allocation17] sm:$0x1]
    %v1844 = vperm.slane %v1842, 0
    %v1846 = vmul.f32 %v1834, %v1844
    %v1847 = vmul.f32 %v1835, %v1844
    %v1848 = vmul.f32 %v1836, %v1844
    %v1849 = vmul.f32 %v1837, %v1844
    %v1850 = vmul.f32 %v1838, %v1844
    %v1851 = vmul.f32 %v1839, %v1844
    %v1852 = vmul.f32 %v1840, %v1844
    %v1853 = vmul.f32 %v1841, %v1844
    %v1854 = vsel %vm479, %v1846, 0.0
    %1855 = vadd.xlane.f32.xlu0 %v1854
    %v1856 = vpop.xlane.xlu0 %1855
    %v1857 = vsel %vm479, %v1847, 0.0
    %1858 = vadd.xlane.f32.xlu0 %v1857
    %v1859 = vpop.xlane.xlu0 %1858
    %v1860 = vsel %vm479, %v1848, 0.0
    %1861 = vadd.xlane.f32.xlu0 %v1860
    %v1862 = vpop.xlane.xlu0 %1861
    %v1863 = vsel %vm479, %v1849, 0.0
    %1864 = vadd.xlane.f32.xlu0 %v1863
    %v1865 = vpop.xlane.xlu0 %1864
    %v1866 = vsel %vm479, %v1850, 0.0
    %1867 = vadd.xlane.f32.xlu0 %v1866
    %v1868 = vpop.xlane.xlu0 %1867
    %v1869 = vsel %vm479, %v1851, 0.0
    %1870 = vadd.xlane.f32.xlu0 %v1869
    %v1871 = vpop.xlane.xlu0 %1870
    %v1872 = vsel %vm479, %v1852, 0.0
    %1873 = vadd.xlane.f32.xlu0 %v1872
    %v1874 = vpop.xlane.xlu0 %1873
    %v1875 = vsel %vm479, %v1853, 0.0
    %1876 = vadd.xlane.f32.xlu0 %v1875
    %v1877 = vpop.xlane.xlu0 %1876
    %v1878 = vld [vmem:[#allocation2] sm:$0x1]
    %v1880 = vperm.slane %v1878, 0
    %v1882 = vadd.f32 %v1856, %v1880
    %v1883 = vadd.f32 %v1859, %v1880
    %v1884 = vadd.f32 %v1862, %v1880
    %v1885 = vadd.f32 %v1865, %v1880
    %v1886 = vadd.f32 %v1868, %v1880
    %v1887 = vadd.f32 %v1871, %v1880
    %v1888 = vadd.f32 %v1874, %v1880
    %v1889 = vadd.f32 %v1877, %v1880
    %vm1890 = vcmask 7168
    %v1891 = vsel %vm1890, %v1882, -inf
    %v1892 = vsel %vm1890, %v1883, -inf
    %v1893 = vsel %vm1890, %v1884, -inf
    %v1894 = vsel %vm1890, %v1885, -inf
    %v1895 = vsel %vm1890, %v1886, -inf
    %v1896 = vmax.f32 %v1891, %v1895
    %v1897 = vsel %vm1890, %v1887, -inf
    %v1898 = vmax.f32 %v1892, %v1897
    %v1899 = vsel %vm1890, %v1888, -inf
    %v1900 = vmax.f32 %v1893, %v1899
    %v1901 = vsel %vm1890, %v1889, -inf
    %v1902 = vmax.f32 %v1894, %v1901
    %v1903 = vmax.f32 %v1896, %v1898
    %v1904 = vmax.f32 %v1900, %v1902
    %v1905 = vmax.f32 %v1903, %v1904
    %v1906 = vsub.f32 %v1882, %v1905
    %v1907 = vsub.f32 %v1883, %v1905
    %v1908 = vsub.f32 %v1884, %v1905
    %v1909 = vsub.f32 %v1885, %v1905
    %v1910 = vsub.f32 %v1886, %v1905
    %v1911 = vsub.f32 %v1887, %v1905
    %v1912 = vsub.f32 %v1888, %v1905
    %v1913 = vsub.f32 %v1889, %v1905
    %v1914 = vmul.f32 %v1906, 1.442695
    %v1915 = vpow.pop %v1914
    %v1916 = vmul.f32 %v1907, 1.442695
    %v1917 = vpow.pop %v1916
    %v1918 = vmul.f32 %v1908, 1.442695
    %v1919 = vpow.pop %v1918
    %v1920 = vmul.f32 %v1909, 1.442695
    %v1921 = vpow.pop %v1920
    %v1922 = vmul.f32 %v1910, 1.442695
    %v1923 = vpow.pop %v1922
    %v1924 = vmul.f32 %v1911, 1.442695
    %v1925 = vpow.pop %v1924
    %v1926 = vmul.f32 %v1912, 1.442695
    %v1927 = vpow.pop %v1926
    %v1928 = vmul.f32 %v1913, 1.442695
    %v1929 = vpow.pop %v1928
    %v1930 = vsel %vm1890, %v1915, 0.0
    %v1931 = vsel %vm1890, %v1917, 0.0
    %v1932 = vadd.f32 %v1930, %v1931
    %v1933 = vsel %vm1890, %v1919, 0.0
    %v1934 = vadd.f32 %v1932, %v1933
    %v1935 = vsel %vm1890, %v1921, 0.0
    %v1936 = vadd.f32 %v1934, %v1935
    %v1937 = vsel %vm1890, %v1923, 0.0
    %v1938 = vadd.f32 %v1936, %v1937
    %v1939 = vsel %vm1890, %v1925, 0.0
    %v1940 = vadd.f32 %v1938, %v1939
    %v1941 = vsel %vm1890, %v1927, 0.0
    %v1942 = vadd.f32 %v1940, %v1941
    %v1943 = vsel %vm1890, %v1929, 0.0
    %v1944 = vadd.f32 %v1942, %v1943
    %1946 = vset.pattern.permute.xlu0 0
    %1947 = vperm.xlu0 %1946, %v1915
    %v1948 = vpop.permute.xlu0 %1947
    %1951 = vset.pattern.permute.xlu0 0
    %1952 = vperm.xlu0 %1951, %v1917
    %v1953 = vpop.permute.xlu0 %1952
    %1956 = vset.pattern.permute.xlu0 0
    %1957 = vperm.xlu0 %1956, %v1919
    %v1958 = vpop.permute.xlu0 %1957
    %1961 = vset.pattern.permute.xlu0 0
    %1962 = vperm.xlu0 %1961, %v1921
    %v1963 = vpop.permute.xlu0 %1962
    %1966 = vset.pattern.permute.xlu0 0
    %1967 = vperm.xlu0 %1966, %v1923
    %v1968 = vpop.permute.xlu0 %1967
    %1971 = vset.pattern.permute.xlu0 0
    %1972 = vperm.xlu0 %1971, %v1925
    %v1973 = vpop.permute.xlu0 %1972
    %1976 = vset.pattern.permute.xlu0 0
    %1977 = vperm.xlu0 %1976, %v1927
    %v1978 = vpop.permute.xlu0 %1977
    %1981 = vset.pattern.permute.xlu0 0
    %1982 = vperm.xlu0 %1981, %v1929
    %v1983 = vpop.permute.xlu0 %1982
    %v1985 = vmul.f32 %v1948, %v1745
    %v1986 = vmul.f32 %v1953, %v1746
    %v1987 = vmul.f32 %v1958, %v1747
    %v1988 = vmul.f32 %v1963, %v1748
    %v1989 = vmul.f32 %v1968, %v1749
    %v1990 = vmul.f32 %v1973, %v1750
    %v1991 = vmul.f32 %v1978, %v1751
    %v1992 = vmul.f32 %v1983, %v1752
    %v1993 = vsel %vm479, %v1985, 0.0
    %v1994 = vsel %vm479, %v1986, 0.0
    %v1995 = vadd.f32 %v1993, %v1994
    %v1996 = vsel %vm479, %v1987, 0.0
    %v1997 = vadd.f32 %v1995, %v1996
    %v1998 = vsel %vm479, %v1988, 0.0
    %v1999 = vadd.f32 %v1997, %v1998
    %v2000 = vsel %vm479, %v1989, 0.0
    %v2001 = vadd.f32 %v1999, %v2000
    %v2002 = vsel %vm479, %v1990, 0.0
    %v2003 = vadd.f32 %v2001, %v2002
    %v2004 = vsel %vm479, %v1991, 0.0
    %v2005 = vadd.f32 %v2003, %v2004
    %v2006 = vsel %vm479, %v1992, 0.0
    %v2007 = vadd.f32 %v2005, %v2006
    %2009 = vset.pattern.permute.xlu0 0
    %2010 = vperm.xlu0 %2009, %v1944
    %v2011 = vpop.permute.xlu0 %2010
    %v2013 = vrcp.pop %v2011
    %v2014 = vmul.f32 %v2011, %v2013
    %v2015 = vsub.f32 1.0, %v2014
    %v2016 = vmul.f32 %v2013, %v2015
    %v2017 = vadd.f32 %v2013, %v2016
    %vm2018 = vweird.f32 %v2011
    %vm2019 = vweird.f32 %v2013
    %vm2020 = vmor %vm2018, %vm2019
    %v2021 = vsel %vm2020, %v2013, %v2017
    %v2022 = vand.u32 2147483647, %v2011
    %vm2023 = vcmp.eq.f32.partialorder %v2022, 8.507059e+37
    %v2024 = vand.u32 %v2011, 2147483648
    %v2025 = vor.u32 1.1754944e-38, %v2024
    %v2026 = vsel %vm2023, %v2025, %v2021
    %v2027 = vmul.f32 %v2007, %v2026
    %v2028 = vpack.c.bf16 %v2027, %v2027
    %v2029 = vld [vmem:[#allocation18] sm:$0xf]
    %v2030 = vld [vmem:[#allocation18 + $0x4] sm:$0xf]
    %v2031 = vld [vmem:[#allocation18 + $0x8] sm:$0xf]
    %v2032 = vld [vmem:[#allocation18 + $0xc] sm:$0xf]
    %v2033 = vld [vmem:[#allocation18 + $0x10] sm:$0xf]
    %v2034 = vld [vmem:[#allocation18 + $0x14] sm:$0xf]
    %v2035 = vld [vmem:[#allocation18 + $0x18] sm:$0xf]
    %v2036 = vld [vmem:[#allocation18 + $0x1c] sm:$0xf]
    %v2037 = vld [vmem:[#allocation20] sm:$0x1]
    %v2039 = vperm.slane %v2037, 0
    %v2049 = vunpack.c.l.b16 %v2029
    %v2050 = vunpack.c.l.b16 %v2030
    %v2051 = vunpack.c.l.b16 %v2031
    %v2052 = vunpack.c.l.b16 %v2032
    %v2053 = vunpack.c.l.b16 %v2033
    %v2054 = vunpack.c.l.b16 %v2034
    %v2055 = vunpack.c.l.b16 %v2035
    %v2056 = vunpack.c.l.b16 %v2036
    %v2057 = vpack.c.b16 %v2050, %v2049
    %v2058 = vpack.c.b16 %v2052, %v2051
    %v2059 = vpack.c.b16 %v2054, %v2053
    %v2060 = vpack.c.b16 %v2056, %v2055
    %v2066 = vsel %vm479, %v2028, 0
    %2068 = vmatpush.bf16.msra.mxu0 0
    %2069 = vmatpush.bf16.msra.mxu0 0
    %2070 = vmatpush.bf16.msra.mxu0 0
    %2071 = vmatpush.bf16.msra.mxu0 0
    %2072 = vmatpush.bf16.msra.mxu0 %v2060
    %2073 = vmatpush.bf16.msra.mxu0 %v2059
    %2074 = vmatpush.bf16.msra.mxu0 %v2058
    %2075 = vmatpush.bf16.msra.mxu0 %v2057
    %2076 = vmatmul.bf16.gmra.mxu0 %v2066
    %v2077 = vpop.f32.mrf.mxu0
    %v2078 = vadd.f32 %v2039, %v2077
    %v2079 = vpop.f32.mrf.mxu0
    %2080 = vdwg.mxu0
    %v2081 = vmax.f32 %v2078, 0.0
    %v2082 = vpack.c.bf16 %v2081, %v2081
    %v2083 = vld [vmem:[%s19] sm:$0xf]
    %v2084 = vld [vmem:[%s19 + $0x4] sm:$0xf]
    %v2085 = vld [vmem:[%s19 + $0x8] sm:$0xf]
    %v2086 = vld [vmem:[%s19 + $0xc] sm:$0xf]
    %v2087 = vld [vmem:[%s19 + $0x10] sm:$0xf]
    %v2088 = vld [vmem:[%s19 + $0x14] sm:$0xf]
    %v2089 = vld [vmem:[%s19 + $0x18] sm:$0xf]
    %v2090 = vld [vmem:[%s19 + $0x1c] sm:$0xf]
    %v2091 = vld [vmem:[#allocation21] sm:$0x1]
    %v2093 = vperm.slane %v2091, 0
    %v2103 = vunpack.c.l.b16 %v2083
    %v2104 = vunpack.c.l.b16 %v2084
    %v2105 = vunpack.c.l.b16 %v2085
    %v2106 = vunpack.c.l.b16 %v2086
    %v2107 = vunpack.c.l.b16 %v2087
    %v2108 = vunpack.c.l.b16 %v2088
    %v2109 = vunpack.c.l.b16 %v2089
    %v2110 = vunpack.c.l.b16 %v2090
    %v2111 = vpack.c.b16 %v2104, %v2103
    %v2112 = vpack.c.b16 %v2106, %v2105
    %v2113 = vpack.c.b16 %v2108, %v2107
    %v2114 = vpack.c.b16 %v2110, %v2109
    %v2120 = vsel %vm479, %v2082, 0
    %2122 = vmatpush.bf16.msra.mxu0 0
    %2123 = vmatpush.bf16.msra.mxu0 0
    %2124 = vmatpush.bf16.msra.mxu0 0
    %2125 = vmatpush.bf16.msra.mxu0 0
    %2126 = vmatpush.bf16.msra.mxu0 %v2114
    %2127 = vmatpush.bf16.msra.mxu0 %v2113
    %2128 = vmatpush.bf16.msra.mxu0 %v2112
    %2129 = vmatpush.bf16.msra.mxu0 %v2111
    %2130 = vmatmul.bf16.gmra.mxu0 %v2120
    %v2131 = vpop.f32.mrf.mxu0
    %v2132 = vadd.f32 %v2093, %v2131
    %v2133 = vpop.f32.mrf.mxu0
    %2134 = vdwg.mxu0
    %v2135 = vmax.f32 %v2132, 0.0
    %v2136 = vld [vmem:[%s21] sm:$0x1]
    %v2138 = vperm.slane %v2136, 0
    %v2140 = vmul.f32 %v2135, %v2138
    %vm2141 = vcmask 261120
    %v2142 = vsel %vm2141, %v2140, 0.0
    %2143 = vadd.xlane.f32.xlu0 %v2142
    %v2144 = vpop.xlane.xlu0 %2143
    %v2145 = vld [vmem:[#allocation3] sm:$0x1]
    %v2147 = vperm.slane %v2145, 0
    %v2149 = vadd.f32 %v2144, %v2147
    %v2150 = vxor.u32 %v2149, 2147483648
    %v2151 = vmul.f32 %v2150, 1.442695
    %v2152 = vpow.pop %v2151
    %v2153 = vadd.f32 %v2152, 1.0
    %v2154 = vrcp.pop %v2153
    %v2155 = vmul.f32 %v2153, %v2154
    %v2156 = vsub.f32 1.0, %v2155
    %v2157 = vmul.f32 %v2154, %v2156
    %v2158 = vadd.f32 %v2154, %v2157
    %vm2159 = vweird.f32 %v2153
    %vm2160 = vweird.f32 %v2154
    %vm2161 = vmor %vm2159, %vm2160
    %v2162 = vsel %vm2161, %v2154, %v2158
    %v2163 = vand.u32 2147483647, %v2153
    %vm2164 = vcmp.eq.f32.partialorder %v2163, 8.507059e+37
    %v2165 = vand.u32 %v2153, 2147483648
    %v2166 = vor.u32 1.1754944e-38, %v2165
    %v2167 = vsel %vm2164, %v2166, %v2162
    %v2168 = vmul.f32 1.0, %v2167
    %2169 = vst.msk [vmem:[%s23] sm:$0xff] %vm1890, %v2168
    // Predicated region
    $region142: #{tpu_custom_call.1} parent=1 // pred_check
      _
    $region143: #{tpu_custom_call.1} parent=1 // pred_check_branch
      %2171 = sbr.rel (0) target = $region145
    $region144: #{tpu_custom_call.1} parent=1 // pred_region
      _
    $region145: #{tpu_custom_call.1} parent=1 // pred_fallthru
      _
    // Predicated region
    $region146: #{tpu_custom_call.1} parent=1 // pred_check
      _
    $region147: #{tpu_custom_call.1} parent=1 // pred_check_branch
      %2173 = sbr.rel (0) target = $region149
    $region148: #{tpu_custom_call.1} parent=1 // pred_region
      _
    $region149: #{tpu_custom_call.1} parent=1 // pred_fallthru
      _
    %2174 = vsyncpa [#allocation5], 1
    %2175 = vsyncpa [#allocation7], 1
    %2176 = vsyncpa [#allocation10], 1
    %2177 = vsyncpa [#allocation13], 1
    %2178 = vsyncpa [#allocation16], 1
    %2179 = vsyncpa [#allocation19], 1
    %2180 = vsyncpa [#allocation22], 1

</llo_original>
